<compile_context>
chip_gen: v7x
topology: tpu7x:2x2x1
jax: 0.10.0
libtpu: 0.0.40
codegen_flags: <defaults>
</compile_context>

<pallas_src>
import jax
import jax.numpy as jnp
from jax.experimental import pallas as pl
from jax.experimental.pallas import tpu as pltpu

BN_EPS = 0.8        # nn.BatchNorm1d(dec_dim, 0.8) -> eps = 0.8
LEAKY_SLOPE = 0.7   # nn.LeakyReLU(0.7)


def _leaky(v):
    # slope < 1  =>  max(x, 0.7*x) == leaky_relu(x, negative_slope=0.7)
    return jnp.maximum(v, LEAKY_SLOPE * v)


def _softplus(v):
    # Numerically stable softplus, matches torch.nn.Softplus (beta=1).
    return jnp.maximum(v, 0.0) + jnp.log1p(jnp.exp(-jnp.abs(v)))


# ------------------------------ Pallas kernel ------------------------------ #
def _make_vae_kernel(z_dim):
    def _vae_kernel(
        # row-tiled inputs
        x_ref, c_ref, eps_ref,
        # encoder weights (resident, pre-transposed to (in, out))
        w1x_ref, w1c_ref, b1_ref,
        w2_ref, b2_ref,
        w3_ref, b3_ref,
        wmv_ref, bmv_ref,            # fused [q_mean | q_var] head
        # decoder weights (BatchNorm eval-affine folded into d2 / d3)
        d1z_ref, d1c_ref, db1_ref,
        d2_ref, db2_ref,
        d3_ref, db3_ref,
        d4_ref, db4_ref,
        # outputs
        xmean_ref, zmu_ref, zvar_ref, z_ref,
    ):
        f32 = jnp.float32
        x = x_ref[...].astype(f32)
        c = c_ref[...].astype(f32)
        eps = eps_ref[...].astype(f32)

        def lin(a, w_ref, b_ref):
            return jnp.dot(a, w_ref[...], preferred_element_type=f32) + b_ref[...]

        # ---- encoder q_z_nn (Dropout = identity at inference) ----
        h = _leaky(jnp.dot(x, w1x_ref[...], preferred_element_type=f32)
                   + jnp.dot(c, w1c_ref[...], preferred_element_type=f32)
                   + b1_ref[...])
        h = _leaky(lin(h, w2_ref, b2_ref))
        h = lin(h, w3_ref, b3_ref)

        # fused mean/var head: one matmul, static lane split
        mv = lin(h, wmv_ref, bmv_ref)              # (tm, 2*z_dim)
        z_mu = mv[:, :z_dim]
        z_var = _softplus(mv[:, z_dim:])

        # ---- reparameterize: z = mu + sqrt(var) * eps ----
        z = z_mu + jnp.sqrt(z_var) * eps

        # ---- decoder p_x_nn + p_x_mean ----
        a = _leaky(jnp.dot(z, d1z_ref[...], preferred_element_type=f32)
                   + jnp.dot(c, d1c_ref[...], preferred_element_type=f32)
                   + db1_ref[...])
        a = lin(a, d2_ref, db2_ref)                # Linear2 + BN1 (folded)
        a = _leaky(lin(a, d3_ref, db3_ref))        # Linear3 + BN2 (folded) + LeakyReLU
        x_mean = _leaky(lin(a, d4_ref, db4_ref))   # p_x_mean: Linear + LeakyReLU

        xmean_ref[...] = x_mean.astype(xmean_ref.dtype)
        zmu_ref[...] = z_mu.astype(zmu_ref.dtype)
        zvar_ref[...] = z_var.astype(zvar_ref.dtype)
        z_ref[...] = z.astype(z_ref.dtype)

    return _vae_kernel


# ------------------------------ JAX wrapper -------------------------------- #
def _fold_bn_into_linear(lin_p, bn_p, eps):
    """Fold eval-mode BatchNorm1d into the preceding Linear. Returns (W^T, b)."""
    s = bn_p["gamma"] / jnp.sqrt(bn_p["var"] + eps)            # (out,)
    w_t = lin_p["w"].T * s[None, :]                            # (in, out)
    b = lin_p["b"] * s + (bn_p["beta"] - bn_p["mean"] * s)     # (out,)
    return w_t, b


@jax.jit
def vae_forward(params, x, c, eps):
    """Matches VAE.forward(x, c) at inference; eps is the reparam noise."""
    n, x_dim = x.shape
    c_dim = c.shape[1]
    z_dim = params["q_mean"]["w"].shape[0]

    f32 = jnp.float32
    x, c, eps = x.astype(f32), c.astype(f32), eps.astype(f32)

    # Pre-transpose weights to (in, out); split the two cat()-fed first layers
    # so the concatenated matrices are never materialized in HBM.
    w1 = params["enc1"]["w"]
    w1x, w1c = w1[:, :x_dim].T, w1[:, x_dim:].T
    b1 = params["enc1"]["b"][None, :]
    w2, b2 = params["enc2"]["w"].T, params["enc2"]["b"][None, :]
    w3, b3 = params["enc3"]["w"].T, params["enc3"]["b"][None, :]
    # fused [q_mean | q_var] head -> one matmul in the kernel
    wmv = jnp.concatenate([params["q_mean"]["w"].T, params["q_var"]["w"].T], axis=1)
    bmv = jnp.concatenate([params["q_mean"]["b"], params["q_var"]["b"]])[None, :]

    d1 = params["dec1"]["w"]
    d1z, d1c = d1[:, :z_dim].T, d1[:, z_dim:].T
    db1 = params["dec1"]["b"][None, :]
    d2, db2 = _fold_bn_into_linear(params["dec2"], params["bn1"], BN_EPS)
    d3, db3 = _fold_bn_into_linear(params["dec3"], params["bn2"], BN_EPS)
    db2, db3 = db2[None, :], db3[None, :]
    d4, db4 = params["dec4"]["w"].T, params["dec4"]["b"][None, :]

    # Row tile: whole batch in one block when small, else 1024-row tiles.
    tm = n if n <= 1024 else 1024
    grid = (pl.cdiv(n, tm),)

    def row_spec(width):
        return pl.BlockSpec((tm, width), lambda i: (i, 0))

    def resident_spec(arr):
        return pl.BlockSpec(arr.shape, lambda i: (0, 0))

    weights = (w1x, w1c, b1, w2, b2, w3, b3, wmv, bmv,
               d1z, d1c, db1, d2, db2, d3, db3, d4, db4)

    in_specs = [row_spec(x_dim), row_spec(c_dim), row_spec(z_dim)]
    in_specs += [resident_spec(w) for w in weights]

    out_shape = (
        jax.ShapeDtypeStruct((n, x_dim), f32),   # x_mean
        jax.ShapeDtypeStruct((n, z_dim), f32),   # z_mu
        jax.ShapeDtypeStruct((n, z_dim), f32),   # z_var
        jax.ShapeDtypeStruct((n, z_dim), f32),   # z
    )
    out_specs = (row_spec(x_dim), row_spec(z_dim),
                 row_spec(z_dim), row_spec(z_dim))

    return pl.pallas_call(
        _make_vae_kernel(z_dim),
        out_shape=out_shape,
        grid_spec=pltpu.PrefetchScalarGridSpec(
            num_scalar_prefetch=0,
            grid=grid,
            in_specs=in_specs,
            out_specs=out_specs,
        ),
        compiler_params=pltpu.CompilerParams(
            dimension_semantics=("parallel",)),
    )(x, c, eps, *weights)


# ------------------------------ init & reference --------------------------- #
def init_vae_params(key, x_dim, c_dim, z_dim, enc_dim, q_out_dim, dec_dim):
    """nn.Linear-style init; BatchNorm gets non-trivial stats to exercise fold."""
    def linear(k, fan_in, fan_out):
        kw, kb = jax.random.split(k)
        lim = 1.0 / jnp.sqrt(fan_in)
        return {"w": jax.random.uniform(kw, (fan_out, fan_in), jnp.float32, -lim, lim),
                "b": jax.random.uniform(kb, (fan_out,), jnp.float32, -lim, lim)}

    def batchnorm(k, dim):
        k1, k2, k3, k4 = jax.random.split(k, 4)
        return {"gamma": jax.random.uniform(k1, (dim,), jnp.float32, 0.5, 1.5),
                "beta": 0.1 * jax.random.normal(k2, (dim,), jnp.float32),
                "mean": 0.1 * jax.random.normal(k3, (dim,), jnp.float32),
                "var": jax.random.uniform(k4, (dim,), jnp.float32, 0.5, 1.5)}

    ks = jax.random.split(key, 11)
    return {
        "enc1": linear(ks[0], x_dim + c_dim, enc_dim),
        "enc2": linear(ks[1], enc_dim, enc_dim),
        "enc3": linear(ks[2], enc_dim, q_out_dim),
        "q_mean": linear(ks[3], q_out_dim, z_dim),
        "q_var": linear(ks[4], q_out_dim, z_dim),
        "dec1": linear(ks[5], z_dim + c_dim, dec_dim),
        "dec2": linear(ks[6], dec_dim, dec_dim),
        "dec3": linear(ks[7], dec_dim, dec_dim),
        "dec4": linear(ks[8], dec_dim, x_dim),
        "bn1": batchnorm(ks[9], dec_dim),
        "bn2": batchnorm(ks[10], dec_dim),
    }


def vae_reference(params, x, c, eps):
    """Pure-JAX reference mirroring the PyTorch forward (eval mode)."""
    def lin(a, p):
        return a @ p["w"].T + p["b"]

    def bn(v, p):
        return p["gamma"] * (v - p["mean"]) / jnp.sqrt(p["var"] + BN_EPS) + p["beta"]

    inp = jnp.concatenate([x, c], axis=1)
    h = _leaky(lin(inp, params["enc1"]))
    h = _leaky(lin(h, params["enc2"]))
    h = lin(h, params["enc3"])
    z_mu = lin(h, params["q_mean"])
    z_var = _softplus(lin(h, params["q_var"]))
    z = z_mu + jnp.sqrt(z_var) * eps
    a = _leaky(lin(jnp.concatenate([z, c], axis=1), params["dec1"]))
    a = bn(lin(a, params["dec2"]), params["bn1"])
    a = _leaky(bn(lin(a, params["dec3"]), params["bn2"]))
    x_mean = _leaky(lin(a, params["dec4"]))
    return x_mean, z_mu, z_var, z


# TODO(synk): training-mode Dropout and batch-statistics BatchNorm are not
# implemented; the kernel uses inference semantics (Dropout = identity, BN
# running stats folded into the preceding Linear).

if __name__ == "__main__":
    # Small dims consistent with the module's args:
    # X_dim, C_dim, Z_dim, vae_encoder_dim, q_z_nn_output_dim, vae_decoder_dim
    X_DIM, C_DIM, Z_DIM = 128, 16, 32
    ENC_DIM, Q_OUT_DIM, DEC_DIM = 128, 64, 128
    BATCH = 64

    key = jax.random.PRNGKey(0)
    kp, kx, kc, ke = jax.random.split(key, 4)
    params = init_vae_params(kp, X_DIM, C_DIM, Z_DIM, ENC_DIM, Q_OUT_DIM, DEC_DIM)

    x = jax.random.normal(kx, (BATCH, X_DIM), jnp.float32)
    c = jax.random.normal(kc, (BATCH, C_DIM), jnp.float32)
    eps = jax.random.normal(ke, (BATCH, Z_DIM), jnp.float32)  # reparam noise

    x_mean, z_mu, z_var, z = jax.block_until_ready(vae_forward(params, x, c, eps))

    with jax.default_matmul_precision("float32"):
        ref_xm, ref_mu, ref_var, ref_z = vae_reference(params, x, c, eps)

    assert x_mean.shape == (BATCH, X_DIM)
    assert z_mu.shape == (BATCH, Z_DIM)
    assert z_var.shape == (BATCH, Z_DIM)
    assert z.shape == (BATCH, Z_DIM)

    for got, want, name in ((x_mean, ref_xm, "x_mean"), (z_mu, ref_mu, "z_mu"),
                            (z_var, ref_var, "z_var"), (z, ref_z, "z")):
        err = float(jnp.max(jnp.abs(got - want)))
        assert jnp.allclose(got, want, atol=1e-3, rtol=1e-3), (name, err)

    print("KERNEL_OK")
</pallas_src>

<mosaic_0001>
module attributes {stable_mosaic.version = 11 : i64} {
  func.func @_vae_kernel(%arg0: i32, %arg1: memref<64x128xf32, #tpu.memory_space<vmem>>, %arg2: memref<64x16xf32, #tpu.memory_space<vmem>>, %arg3: memref<64x32xf32, #tpu.memory_space<vmem>>, %arg4: memref<128x128xf32, #tpu.memory_space<vmem>>, %arg5: memref<16x128xf32, #tpu.memory_space<vmem>>, %arg6: memref<1x128xf32, #tpu.memory_space<vmem>>, %arg7: memref<128x128xf32, #tpu.memory_space<vmem>>, %arg8: memref<1x128xf32, #tpu.memory_space<vmem>>, %arg9: memref<128x64xf32, #tpu.memory_space<vmem>>, %arg10: memref<1x64xf32, #tpu.memory_space<vmem>>, %arg11: memref<64x64xf32, #tpu.memory_space<vmem>>, %arg12: memref<1x64xf32, #tpu.memory_space<vmem>>, %arg13: memref<32x128xf32, #tpu.memory_space<vmem>>, %arg14: memref<16x128xf32, #tpu.memory_space<vmem>>, %arg15: memref<1x128xf32, #tpu.memory_space<vmem>>, %arg16: memref<128x128xf32, #tpu.memory_space<vmem>>, %arg17: memref<1x128xf32, #tpu.memory_space<vmem>>, %arg18: memref<128x128xf32, #tpu.memory_space<vmem>>, %arg19: memref<1x128xf32, #tpu.memory_space<vmem>>, %arg20: memref<128x128xf32, #tpu.memory_space<vmem>>, %arg21: memref<1x128xf32, #tpu.memory_space<vmem>>, %arg22: memref<64x128xf32, #tpu.memory_space<vmem>>, %arg23: memref<64x32xf32, #tpu.memory_space<vmem>>, %arg24: memref<64x32xf32, #tpu.memory_space<vmem>>, %arg25: memref<64x32xf32, #tpu.memory_space<vmem>>) attributes {dimension_semantics = [#tpu.dimension_semantics<parallel>], iteration_bounds = array<i64: 1>, scalar_prefetch = 0 : i64, scratch_operands = 0 : i64, tpu.core_type = #tpu.core_type<tc>, window_params = [{transform_indices = @transform_0, window_bounds = array<i64: 64, 128>}, {transform_indices = @transform_1, window_bounds = array<i64: 64, 16>}, {transform_indices = @transform_2, window_bounds = array<i64: 64, 32>}, {pipeline_mode = #tpu.pipeline_mode<synchronous>, transform_indices = @transform_3, window_bounds = array<i64: 128, 128>}, {pipeline_mode = #tpu.pipeline_mode<synchronous>, transform_indices = @transform_4, window_bounds = array<i64: 16, 128>}, {pipeline_mode = #tpu.pipeline_mode<synchronous>, transform_indices = @transform_5, window_bounds = array<i64: 1, 128>}, {pipeline_mode = #tpu.pipeline_mode<synchronous>, transform_indices = @transform_6, window_bounds = array<i64: 128, 128>}, {pipeline_mode = #tpu.pipeline_mode<synchronous>, transform_indices = @transform_7, window_bounds = array<i64: 1, 128>}, {pipeline_mode = #tpu.pipeline_mode<synchronous>, transform_indices = @transform_8, window_bounds = array<i64: 128, 64>}, {pipeline_mode = #tpu.pipeline_mode<synchronous>, transform_indices = @transform_9, window_bounds = array<i64: 1, 64>}, {pipeline_mode = #tpu.pipeline_mode<synchronous>, transform_indices = @transform_10, window_bounds = array<i64: 64, 64>}, {pipeline_mode = #tpu.pipeline_mode<synchronous>, transform_indices = @transform_11, window_bounds = array<i64: 1, 64>}, {pipeline_mode = #tpu.pipeline_mode<synchronous>, transform_indices = @transform_12, window_bounds = array<i64: 32, 128>}, {pipeline_mode = #tpu.pipeline_mode<synchronous>, transform_indices = @transform_13, window_bounds = array<i64: 16, 128>}, {pipeline_mode = #tpu.pipeline_mode<synchronous>, transform_indices = @transform_14, window_bounds = array<i64: 1, 128>}, {pipeline_mode = #tpu.pipeline_mode<synchronous>, transform_indices = @transform_15, window_bounds = array<i64: 128, 128>}, {pipeline_mode = #tpu.pipeline_mode<synchronous>, transform_indices = @transform_16, window_bounds = array<i64: 1, 128>}, {pipeline_mode = #tpu.pipeline_mode<synchronous>, transform_indices = @transform_17, window_bounds = array<i64: 128, 128>}, {pipeline_mode = #tpu.pipeline_mode<synchronous>, transform_indices = @transform_18, window_bounds = array<i64: 1, 128>}, {pipeline_mode = #tpu.pipeline_mode<synchronous>, transform_indices = @transform_19, window_bounds = array<i64: 128, 128>}, {pipeline_mode = #tpu.pipeline_mode<synchronous>, transform_indices = @transform_20, window_bounds = array<i64: 1, 128>}, {transform_indices = @transform_21, window_bounds = array<i64: 64, 128>}, {transform_indices = @transform_22, window_bounds = array<i64: 64, 32>}, {transform_indices = @transform_23, window_bounds = array<i64: 64, 32>}, {transform_indices = @transform_24, window_bounds = array<i64: 64, 32>}]} {
    %c0 = arith.constant 0 : index
    %c0_0 = arith.constant 0 : index
    %0 = vector.load %arg1[%c0, %c0_0] : memref<64x128xf32, #tpu.memory_space<vmem>>, vector<64x128xf32>
    %c0_1 = arith.constant 0 : index
    %c0_2 = arith.constant 0 : index
    %1 = vector.load %arg2[%c0_1, %c0_2] : memref<64x16xf32, #tpu.memory_space<vmem>>, vector<64x16xf32>
    %c0_3 = arith.constant 0 : index
    %c0_4 = arith.constant 0 : index
    %2 = vector.load %arg3[%c0_3, %c0_4] : memref<64x32xf32, #tpu.memory_space<vmem>>, vector<64x32xf32>
    %c0_5 = arith.constant 0 : index
    %c0_6 = arith.constant 0 : index
    %3 = vector.load %arg4[%c0_5, %c0_6] : memref<128x128xf32, #tpu.memory_space<vmem>>, vector<128x128xf32>
    %cst = arith.constant dense<0.000000e+00> : vector<64x128xf32>
    %4 = tpu.matmul %0, %3, %cst {dimension_numbers = #tpu.dot_dimension_numbers<[1], [0], [0], [1], [0, 0, 1, 1], [], []>} : vector<64x128xf32>, vector<128x128xf32>, vector<64x128xf32> -> vector<64x128xf32>
    %c0_7 = arith.constant 0 : index
    %c0_8 = arith.constant 0 : index
    %5 = vector.load %arg5[%c0_7, %c0_8] : memref<16x128xf32, #tpu.memory_space<vmem>>, vector<16x128xf32>
    %cst_9 = arith.constant dense<0.000000e+00> : vector<64x128xf32>
    %6 = tpu.matmul %1, %5, %cst_9 {dimension_numbers = #tpu.dot_dimension_numbers<[1], [0], [0], [1], [0, 0, 1, 1], [], []>} : vector<64x16xf32>, vector<16x128xf32>, vector<64x128xf32> -> vector<64x128xf32>
    %7 = arith.addf %4, %6 : vector<64x128xf32>
    %c0_10 = arith.constant 0 : index
    %c0_11 = arith.constant 0 : index
    %8 = vector.load %arg6[%c0_10, %c0_11] : memref<1x128xf32, #tpu.memory_space<vmem>>, vector<1x128xf32>
    %9 = vector.broadcast %8 : vector<1x128xf32> to vector<64x128xf32>
    %10 = arith.addf %7, %9 : vector<64x128xf32>
    %cst_12 = arith.constant 0.699999988 : f32
    %11 = vector.broadcast %cst_12 : f32 to vector<64x128xf32>
    %12 = arith.mulf %11, %10 : vector<64x128xf32>
    %13 = arith.maximumf %10, %12 : vector<64x128xf32>
    %c0_13 = arith.constant 0 : index
    %c0_14 = arith.constant 0 : index
    %14 = vector.load %arg7[%c0_13, %c0_14] : memref<128x128xf32, #tpu.memory_space<vmem>>, vector<128x128xf32>
    %cst_15 = arith.constant dense<0.000000e+00> : vector<64x128xf32>
    %15 = tpu.matmul %13, %14, %cst_15 {dimension_numbers = #tpu.dot_dimension_numbers<[1], [0], [0], [1], [0, 0, 1, 1], [], []>} : vector<64x128xf32>, vector<128x128xf32>, vector<64x128xf32> -> vector<64x128xf32>
    %c0_16 = arith.constant 0 : index
    %c0_17 = arith.constant 0 : index
    %16 = vector.load %arg8[%c0_16, %c0_17] : memref<1x128xf32, #tpu.memory_space<vmem>>, vector<1x128xf32>
    %17 = vector.broadcast %16 : vector<1x128xf32> to vector<64x128xf32>
    %18 = arith.addf %15, %17 : vector<64x128xf32>
    %cst_18 = arith.constant 0.699999988 : f32
    %19 = vector.broadcast %cst_18 : f32 to vector<64x128xf32>
    %20 = arith.mulf %19, %18 : vector<64x128xf32>
    %21 = arith.maximumf %18, %20 : vector<64x128xf32>
    %c0_19 = arith.constant 0 : index
    %c0_20 = arith.constant 0 : index
    %22 = vector.load %arg9[%c0_19, %c0_20] : memref<128x64xf32, #tpu.memory_space<vmem>>, vector<128x64xf32>
    %cst_21 = arith.constant dense<0.000000e+00> : vector<64x64xf32>
    %23 = tpu.matmul %21, %22, %cst_21 {dimension_numbers = #tpu.dot_dimension_numbers<[1], [0], [0], [1], [0, 0, 1, 1], [], []>} : vector<64x128xf32>, vector<128x64xf32>, vector<64x64xf32> -> vector<64x64xf32>
    %c0_22 = arith.constant 0 : index
    %c0_23 = arith.constant 0 : index
    %24 = vector.load %arg10[%c0_22, %c0_23] : memref<1x64xf32, #tpu.memory_space<vmem>>, vector<1x64xf32>
    %25 = vector.broadcast %24 : vector<1x64xf32> to vector<64x64xf32>
    %26 = arith.addf %23, %25 : vector<64x64xf32>
    %c0_24 = arith.constant 0 : index
    %c0_25 = arith.constant 0 : index
    %27 = vector.load %arg11[%c0_24, %c0_25] : memref<64x64xf32, #tpu.memory_space<vmem>>, vector<64x64xf32>
    %cst_26 = arith.constant dense<0.000000e+00> : vector<64x64xf32>
    %28 = tpu.matmul %26, %27, %cst_26 {dimension_numbers = #tpu.dot_dimension_numbers<[1], [0], [0], [1], [0, 0, 1, 1], [], []>} : vector<64x64xf32>, vector<64x64xf32>, vector<64x64xf32> -> vector<64x64xf32>
    %c0_27 = arith.constant 0 : index
    %c0_28 = arith.constant 0 : index
    %29 = vector.load %arg12[%c0_27, %c0_28] : memref<1x64xf32, #tpu.memory_space<vmem>>, vector<1x64xf32>
    %30 = vector.broadcast %29 : vector<1x64xf32> to vector<64x64xf32>
    %31 = arith.addf %28, %30 : vector<64x64xf32>
    %32 = vector.extract_strided_slice %31 {offsets = [0, 0], sizes = [64, 32], strides = [1, 1]} : vector<64x64xf32> to vector<64x32xf32>
    %33 = vector.extract_strided_slice %31 {offsets = [0, 32], sizes = [64, 32], strides = [1, 1]} : vector<64x64xf32> to vector<64x32xf32>
    %cst_29 = arith.constant 0.000000e+00 : f32
    %34 = vector.broadcast %cst_29 : f32 to vector<64x32xf32>
    %35 = arith.maximumf %33, %34 : vector<64x32xf32>
    %36 = math.absf %33 : vector<64x32xf32>
    %cst_30 = arith.constant 0.000000e+00 : f32
    %37 = vector.broadcast %cst_30 : f32 to vector<64x32xf32>
    %38 = arith.subf %37, %36 : vector<64x32xf32>
    %39 = math.exp %38 : vector<64x32xf32>
    %40 = math.log1p %39 : vector<64x32xf32>
    %41 = arith.addf %35, %40 : vector<64x32xf32>
    %42 = math.sqrt %41 : vector<64x32xf32>
    %43 = arith.mulf %42, %2 : vector<64x32xf32>
    %44 = arith.addf %32, %43 : vector<64x32xf32>
    %c0_31 = arith.constant 0 : index
    %c0_32 = arith.constant 0 : index
    %45 = vector.load %arg13[%c0_31, %c0_32] : memref<32x128xf32, #tpu.memory_space<vmem>>, vector<32x128xf32>
    %cst_33 = arith.constant dense<0.000000e+00> : vector<64x128xf32>
    %46 = tpu.matmul %44, %45, %cst_33 {dimension_numbers = #tpu.dot_dimension_numbers<[1], [0], [0], [1], [0, 0, 1, 1], [], []>} : vector<64x32xf32>, vector<32x128xf32>, vector<64x128xf32> -> vector<64x128xf32>
    %c0_34 = arith.constant 0 : index
    %c0_35 = arith.constant 0 : index
    %47 = vector.load %arg14[%c0_34, %c0_35] : memref<16x128xf32, #tpu.memory_space<vmem>>, vector<16x128xf32>
    %cst_36 = arith.constant dense<0.000000e+00> : vector<64x128xf32>
    %48 = tpu.matmul %1, %47, %cst_36 {dimension_numbers = #tpu.dot_dimension_numbers<[1], [0], [0], [1], [0, 0, 1, 1], [], []>} : vector<64x16xf32>, vector<16x128xf32>, vector<64x128xf32> -> vector<64x128xf32>
    %49 = arith.addf %46, %48 : vector<64x128xf32>
    %c0_37 = arith.constant 0 : index
    %c0_38 = arith.constant 0 : index
    %50 = vector.load %arg15[%c0_37, %c0_38] : memref<1x128xf32, #tpu.memory_space<vmem>>, vector<1x128xf32>
    %51 = vector.broadcast %50 : vector<1x128xf32> to vector<64x128xf32>
    %52 = arith.addf %49, %51 : vector<64x128xf32>
    %cst_39 = arith.constant 0.699999988 : f32
    %53 = vector.broadcast %cst_39 : f32 to vector<64x128xf32>
    %54 = arith.mulf %53, %52 : vector<64x128xf32>
    %55 = arith.maximumf %52, %54 : vector<64x128xf32>
    %c0_40 = arith.constant 0 : index
    %c0_41 = arith.constant 0 : index
    %56 = vector.load %arg16[%c0_40, %c0_41] : memref<128x128xf32, #tpu.memory_space<vmem>>, vector<128x128xf32>
    %cst_42 = arith.constant dense<0.000000e+00> : vector<64x128xf32>
    %57 = tpu.matmul %55, %56, %cst_42 {dimension_numbers = #tpu.dot_dimension_numbers<[1], [0], [0], [1], [0, 0, 1, 1], [], []>} : vector<64x128xf32>, vector<128x128xf32>, vector<64x128xf32> -> vector<64x128xf32>
    %c0_43 = arith.constant 0 : index
    %c0_44 = arith.constant 0 : index
    %58 = vector.load %arg17[%c0_43, %c0_44] : memref<1x128xf32, #tpu.memory_space<vmem>>, vector<1x128xf32>
    %59 = vector.broadcast %58 : vector<1x128xf32> to vector<64x128xf32>
    %60 = arith.addf %57, %59 : vector<64x128xf32>
    %c0_45 = arith.constant 0 : index
    %c0_46 = arith.constant 0 : index
    %61 = vector.load %arg18[%c0_45, %c0_46] : memref<128x128xf32, #tpu.memory_space<vmem>>, vector<128x128xf32>
    %cst_47 = arith.constant dense<0.000000e+00> : vector<64x128xf32>
    %62 = tpu.matmul %60, %61, %cst_47 {dimension_numbers = #tpu.dot_dimension_numbers<[1], [0], [0], [1], [0, 0, 1, 1], [], []>} : vector<64x128xf32>, vector<128x128xf32>, vector<64x128xf32> -> vector<64x128xf32>
    %c0_48 = arith.constant 0 : index
    %c0_49 = arith.constant 0 : index
    %63 = vector.load %arg19[%c0_48, %c0_49] : memref<1x128xf32, #tpu.memory_space<vmem>>, vector<1x128xf32>
    %64 = vector.broadcast %63 : vector<1x128xf32> to vector<64x128xf32>
    %65 = arith.addf %62, %64 : vector<64x128xf32>
    %cst_50 = arith.constant 0.699999988 : f32
    %66 = vector.broadcast %cst_50 : f32 to vector<64x128xf32>
    %67 = arith.mulf %66, %65 : vector<64x128xf32>
    %68 = arith.maximumf %65, %67 : vector<64x128xf32>
    %c0_51 = arith.constant 0 : index
    %c0_52 = arith.constant 0 : index
    %69 = vector.load %arg20[%c0_51, %c0_52] : memref<128x128xf32, #tpu.memory_space<vmem>>, vector<128x128xf32>
    %cst_53 = arith.constant dense<0.000000e+00> : vector<64x128xf32>
    %70 = tpu.matmul %68, %69, %cst_53 {dimension_numbers = #tpu.dot_dimension_numbers<[1], [0], [0], [1], [0, 0, 1, 1], [], []>} : vector<64x128xf32>, vector<128x128xf32>, vector<64x128xf32> -> vector<64x128xf32>
    %c0_54 = arith.constant 0 : index
    %c0_55 = arith.constant 0 : index
    %71 = vector.load %arg21[%c0_54, %c0_55] : memref<1x128xf32, #tpu.memory_space<vmem>>, vector<1x128xf32>
    %72 = vector.broadcast %71 : vector<1x128xf32> to vector<64x128xf32>
    %73 = arith.addf %70, %72 : vector<64x128xf32>
    %cst_56 = arith.constant 0.699999988 : f32
    %74 = vector.broadcast %cst_56 : f32 to vector<64x128xf32>
    %75 = arith.mulf %74, %73 : vector<64x128xf32>
    %76 = arith.maximumf %73, %75 : vector<64x128xf32>
    %c0_57 = arith.constant 0 : index
    %c0_58 = arith.constant 0 : index
    %77 = vector.load %arg22[%c0_57, %c0_58] : memref<64x128xf32, #tpu.memory_space<vmem>>, vector<64x128xf32>
    tpu.vector_store %arg22[%c0_57, %c0_58], %76 {strides = array<i32>} : memref<64x128xf32, #tpu.memory_space<vmem>>, vector<64x128xf32>,
    %c0_59 = arith.constant 0 : index
    %c0_60 = arith.constant 0 : index
    %78 = vector.load %arg23[%c0_59, %c0_60] : memref<64x32xf32, #tpu.memory_space<vmem>>, vector<64x32xf32>
    tpu.vector_store %arg23[%c0_59, %c0_60], %32 {strides = array<i32>} : memref<64x32xf32, #tpu.memory_space<vmem>>, vector<64x32xf32>,
    %c0_61 = arith.constant 0 : index
    %c0_62 = arith.constant 0 : index
    %79 = vector.load %arg24[%c0_61, %c0_62] : memref<64x32xf32, #tpu.memory_space<vmem>>, vector<64x32xf32>
    tpu.vector_store %arg24[%c0_61, %c0_62], %41 {strides = array<i32>} : memref<64x32xf32, #tpu.memory_space<vmem>>, vector<64x32xf32>,
    %c0_63 = arith.constant 0 : index
    %c0_64 = arith.constant 0 : index
    %80 = vector.load %arg25[%c0_63, %c0_64] : memref<64x32xf32, #tpu.memory_space<vmem>>, vector<64x32xf32>
    tpu.vector_store %arg25[%c0_63, %c0_64], %44 {strides = array<i32>} : memref<64x32xf32, #tpu.memory_space<vmem>>, vector<64x32xf32>,
    return
  }
  func.func @transform_0(%arg0: i32) -> (i32, i32) {
    %c0_i32 = arith.constant 0 : i32
    %c0_i32_0 = arith.constant 0 : i32
    return %arg0, %c0_i32 : i32, i32
  }
  func.func @transform_1(%arg0: i32) -> (i32, i32) {
    %c0_i32 = arith.constant 0 : i32
    %c0_i32_0 = arith.constant 0 : i32
    return %arg0, %c0_i32 : i32, i32
  }
  func.func @transform_2(%arg0: i32) -> (i32, i32) {
    %c0_i32 = arith.constant 0 : i32
    %c0_i32_0 = arith.constant 0 : i32
    return %arg0, %c0_i32 : i32, i32
  }
  func.func @transform_3(%arg0: i32) -> (i32, i32) {
    %c0_i32 = arith.constant 0 : i32
    %c0_i32_0 = arith.constant 0 : i32
    %c0_i32_1 = arith.constant 0 : i32
    return %c0_i32, %c0_i32_0 : i32, i32
  }
  func.func @transform_4(%arg0: i32) -> (i32, i32) {
    %c0_i32 = arith.constant 0 : i32
    %c0_i32_0 = arith.constant 0 : i32
    %c0_i32_1 = arith.constant 0 : i32
    return %c0_i32, %c0_i32_0 : i32, i32
  }
  func.func @transform_5(%arg0: i32) -> (i32, i32) {
    %c0_i32 = arith.constant 0 : i32
    %c0_i32_0 = arith.constant 0 : i32
    %c0_i32_1 = arith.constant 0 : i32
    return %c0_i32, %c0_i32_0 : i32, i32
  }
  func.func @transform_6(%arg0: i32) -> (i32, i32) {
    %c0_i32 = arith.constant 0 : i32
    %c0_i32_0 = arith.constant 0 : i32
    %c0_i32_1 = arith.constant 0 : i32
    return %c0_i32, %c0_i32_0 : i32, i32
  }
  func.func @transform_7(%arg0: i32) -> (i32, i32) {
    %c0_i32 = arith.constant 0 : i32
    %c0_i32_0 = arith.constant 0 : i32
    %c0_i32_1 = arith.constant 0 : i32
    return %c0_i32, %c0_i32_0 : i32, i32
  }
  func.func @transform_8(%arg0: i32) -> (i32, i32) {
    %c0_i32 = arith.constant 0 : i32
    %c0_i32_0 = arith.constant 0 : i32
    %c0_i32_1 = arith.constant 0 : i32
    return %c0_i32, %c0_i32_0 : i32, i32
  }
  func.func @transform_9(%arg0: i32) -> (i32, i32) {
    %c0_i32 = arith.constant 0 : i32
    %c0_i32_0 = arith.constant 0 : i32
    %c0_i32_1 = arith.constant 0 : i32
    return %c0_i32, %c0_i32_0 : i32, i32
  }
  func.func @transform_10(%arg0: i32) -> (i32, i32) {
    %c0_i32 = arith.constant 0 : i32
    %c0_i32_0 = arith.constant 0 : i32
    %c0_i32_1 = arith.constant 0 : i32
    return %c0_i32, %c0_i32_0 : i32, i32
  }
  func.func @transform_11(%arg0: i32) -> (i32, i32) {
    %c0_i32 = arith.constant 0 : i32
    %c0_i32_0 = arith.constant 0 : i32
    %c0_i32_1 = arith.constant 0 : i32
    return %c0_i32, %c0_i32_0 : i32, i32
  }
  func.func @transform_12(%arg0: i32) -> (i32, i32) {
    %c0_i32 = arith.constant 0 : i32
    %c0_i32_0 = arith.constant 0 : i32
    %c0_i32_1 = arith.constant 0 : i32
    return %c0_i32, %c0_i32_0 : i32, i32
  }
  func.func @transform_13(%arg0: i32) -> (i32, i32) {
    %c0_i32 = arith.constant 0 : i32
    %c0_i32_0 = arith.constant 0 : i32
    %c0_i32_1 = arith.constant 0 : i32
    return %c0_i32, %c0_i32_0 : i32, i32
  }
  func.func @transform_14(%arg0: i32) -> (i32, i32) {
    %c0_i32 = arith.constant 0 : i32
    %c0_i32_0 = arith.constant 0 : i32
    %c0_i32_1 = arith.constant 0 : i32
    return %c0_i32, %c0_i32_0 : i32, i32
  }
  func.func @transform_15(%arg0: i32) -> (i32, i32) {
    %c0_i32 = arith.constant 0 : i32
    %c0_i32_0 = arith.constant 0 : i32
    %c0_i32_1 = arith.constant 0 : i32
    return %c0_i32, %c0_i32_0 : i32, i32
  }
  func.func @transform_16(%arg0: i32) -> (i32, i32) {
    %c0_i32 = arith.constant 0 : i32
    %c0_i32_0 = arith.constant 0 : i32
    %c0_i32_1 = arith.constant 0 : i32
    return %c0_i32, %c0_i32_0 : i32, i32
  }
  func.func @transform_17(%arg0: i32) -> (i32, i32) {
    %c0_i32 = arith.constant 0 : i32
    %c0_i32_0 = arith.constant 0 : i32
    %c0_i32_1 = arith.constant 0 : i32
    return %c0_i32, %c0_i32_0 : i32, i32
  }
  func.func @transform_18(%arg0: i32) -> (i32, i32) {
    %c0_i32 = arith.constant 0 : i32
    %c0_i32_0 = arith.constant 0 : i32
    %c0_i32_1 = arith.constant 0 : i32
    return %c0_i32, %c0_i32_0 : i32, i32
  }
  func.func @transform_19(%arg0: i32) -> (i32, i32) {
    %c0_i32 = arith.constant 0 : i32
    %c0_i32_0 = arith.constant 0 : i32
    %c0_i32_1 = arith.constant 0 : i32
    return %c0_i32, %c0_i32_0 : i32, i32
  }
  func.func @transform_20(%arg0: i32) -> (i32, i32) {
    %c0_i32 = arith.constant 0 : i32
    %c0_i32_0 = arith.constant 0 : i32
    %c0_i32_1 = arith.constant 0 : i32
    return %c0_i32, %c0_i32_0 : i32, i32
  }
  func.func @transform_21(%arg0: i32) -> (i32, i32) {
    %c0_i32 = arith.constant 0 : i32
    %c0_i32_0 = arith.constant 0 : i32
    return %arg0, %c0_i32 : i32, i32
  }
  func.func @transform_22(%arg0: i32) -> (i32, i32) {
    %c0_i32 = arith.constant 0 : i32
    %c0_i32_0 = arith.constant 0 : i32
    return %arg0, %c0_i32 : i32, i32
  }
  func.func @transform_23(%arg0: i32) -> (i32, i32) {
    %c0_i32 = arith.constant 0 : i32
    %c0_i32_0 = arith.constant 0 : i32
    return %arg0, %c0_i32 : i32, i32
  }
  func.func @transform_24(%arg0: i32) -> (i32, i32) {
    %c0_i32 = arith.constant 0 : i32
    %c0_i32_0 = arith.constant 0 : i32
    return %arg0, %c0_i32 : i32, i32
  }
}

</mosaic_0001>

<llo_original>
// kernel: vae_forward.1
$region0: #{vae_forward.1}
  #allocation0 [shape = 'u32[]', space=smem, size = 0x4, offset = 0x4, fixed_abs, tag = 'smem constant byte address 0x4 - core index']
  #allocation1 [shape = 'u32[144,128]{1,0:T(1,128)}', space=vmem, size = 0x12000, scoped, tag = 'internal scratch']
  %s0 = inlined_call_operand.vmem [shape: f32[64,128], index: 0, kind: input, shape index: {}]
  %s1 = inlined_call_operand.vmem [shape: f32[64,16], index: 1, kind: input, shape index: {}]
  %s2 = inlined_call_operand.vmem [shape: f32[64,32], index: 2, kind: input, shape index: {}]
  %s3 = inlined_call_operand.vmem [shape: f32[128,128], index: 3, kind: input, shape index: {}]
  %s4 = inlined_call_operand.vmem [shape: f32[16,128], index: 4, kind: input, shape index: {}]
  %s5 = inlined_call_operand.vmem [shape: f32[1,128], index: 5, kind: input, shape index: {}]
  %s6 = inlined_call_operand.vmem [shape: f32[128,128], index: 6, kind: input, shape index: {}]
  %s7 = inlined_call_operand.vmem [shape: f32[1,128], index: 7, kind: input, shape index: {}]
  %s8 = inlined_call_operand.vmem [shape: f32[128,64], index: 8, kind: input, shape index: {}]
  %s9 = inlined_call_operand.vmem [shape: f32[1,64], index: 9, kind: input, shape index: {}]
  %s10 = inlined_call_operand.vmem [shape: f32[64,64], index: 10, kind: input, shape index: {}]
  %s11 = inlined_call_operand.vmem [shape: f32[1,64], index: 11, kind: input, shape index: {}]
  %s12 = inlined_call_operand.vmem [shape: f32[32,128], index: 12, kind: input, shape index: {}]
  %s13 = inlined_call_operand.vmem [shape: f32[16,128], index: 13, kind: input, shape index: {}]
  %s14 = inlined_call_operand.vmem [shape: f32[1,128], index: 14, kind: input, shape index: {}]
  %s15 = inlined_call_operand.vmem [shape: f32[128,128], index: 15, kind: input, shape index: {}]
  %s16 = inlined_call_operand.vmem [shape: f32[1,128], index: 16, kind: input, shape index: {}]
  %s17 = inlined_call_operand.vmem [shape: f32[128,128], index: 17, kind: input, shape index: {}]
  %s18 = inlined_call_operand.vmem [shape: f32[1,128], index: 18, kind: input, shape index: {}]
  %s19 = inlined_call_operand.vmem [shape: f32[128,128], index: 19, kind: input, shape index: {}]
  %s20 = inlined_call_operand.vmem [shape: f32[1,128], index: 20, kind: input, shape index: {}]
  %s21 = inlined_call_operand.hbm [shape: f32[64,128], index: 21, kind: output, shape index: {0}]
  %s22 = inlined_call_operand.vmem [shape: f32[64,32], index: 22, kind: output, shape index: {1}]
  %s23 = inlined_call_operand.vmem [shape: f32[64,32], index: 23, kind: output, shape index: {2}]
  %s24 = inlined_call_operand.vmem [shape: f32[64,32], index: 24, kind: output, shape index: {3}]
  %25 = xla_tuple %s21, %s22, %s23, %s24
  %s26 = sld [smem:[#allocation0]]
  $region118: #{vae_forward.1} parent=0
    _
  %s28 = ssub.s32 1, %s26
  %s29 = scalar_select 0, %s28, %s26
  $region1: #{vae_forward.1} parent=0
    #allocation2 [shape = 'u8[32768]{0}', space=vmem, size = 0x8000, scoped, tag = 'output window, operand 0, single buffered']
    #allocation3 [shape = 's32[1]{0}', space=sflag, size = 0x4, scoped, tag = 'scoped memory for vae_forward.1']
    %30 = vsyncpa [#allocation3], 0
    // Predicated region
    $region2: #{vae_forward.1} parent=1 // pred_check
      _
    $region3: #{vae_forward.1} parent=1 // pred_check_branch
      %32 = sbr.rel (0) target = $region5
    $region4: #{vae_forward.1} parent=1 // pred_region
      _
    $region5: #{vae_forward.1} parent=1 // pred_fallthru
      _
    // Predicated region
    $region6: #{vae_forward.1} parent=1 // pred_check
      _
    $region7: #{vae_forward.1} parent=1 // pred_check_branch
      %34 = sbr.rel (0) target = $region9
    $region8: #{vae_forward.1} parent=1 // pred_region
      _
    $region9: #{vae_forward.1} parent=1 // pred_fallthru
      _
    // Predicated region
    $region10: #{vae_forward.1} parent=1 // pred_check
      _
    $region11: #{vae_forward.1} parent=1 // pred_check_branch
      %36 = sbr.rel (0) target = $region13
    $region12: #{vae_forward.1} parent=1 // pred_region
      _
    $region13: #{vae_forward.1} parent=1 // pred_fallthru
      _
    // Predicated region
    $region14: #{vae_forward.1} parent=1 // pred_check
      _
    $region15: #{vae_forward.1} parent=1 // pred_check_branch
      %38 = sbr.rel (0) target = $region17
    $region16: #{vae_forward.1} parent=1 // pred_region
      _
    $region17: #{vae_forward.1} parent=1 // pred_fallthru
      _
    // Predicated region
    $region18: #{vae_forward.1} parent=1 // pred_check
      _
    $region19: #{vae_forward.1} parent=1 // pred_check_branch
      %40 = sbr.rel (0) target = $region21
    $region20: #{vae_forward.1} parent=1 // pred_region
      _
    $region21: #{vae_forward.1} parent=1 // pred_fallthru
      _
    // Predicated region
    $region22: #{vae_forward.1} parent=1 // pred_check
      _
    $region23: #{vae_forward.1} parent=1 // pred_check_branch
      %42 = sbr.rel (0) target = $region25
    $region24: #{vae_forward.1} parent=1 // pred_region
      _
    $region25: #{vae_forward.1} parent=1 // pred_fallthru
      _
    // Predicated region
    $region26: #{vae_forward.1} parent=1 // pred_check
      _
    $region27: #{vae_forward.1} parent=1 // pred_check_branch
      %44 = sbr.rel (0) target = $region29
    $region28: #{vae_forward.1} parent=1 // pred_region
      _
    $region29: #{vae_forward.1} parent=1 // pred_fallthru
      _
    // Predicated region
    $region30: #{vae_forward.1} parent=1 // pred_check
      _
    $region31: #{vae_forward.1} parent=1 // pred_check_branch
      %46 = sbr.rel (0) target = $region33
    $region32: #{vae_forward.1} parent=1 // pred_region
      _
    $region33: #{vae_forward.1} parent=1 // pred_fallthru
      _
    // Predicated region
    $region34: #{vae_forward.1} parent=1 // pred_check
      _
    $region35: #{vae_forward.1} parent=1 // pred_check_branch
      %48 = sbr.rel (0) target = $region37
    $region36: #{vae_forward.1} parent=1 // pred_region
      _
    $region37: #{vae_forward.1} parent=1 // pred_fallthru
      _
    // Predicated region
    $region38: #{vae_forward.1} parent=1 // pred_check
      _
    $region39: #{vae_forward.1} parent=1 // pred_check_branch
      %50 = sbr.rel (0) target = $region41
    $region40: #{vae_forward.1} parent=1 // pred_region
      _
    $region41: #{vae_forward.1} parent=1 // pred_fallthru
      _
    // Predicated region
    $region42: #{vae_forward.1} parent=1 // pred_check
      _
    $region43: #{vae_forward.1} parent=1 // pred_check_branch
      %52 = sbr.rel (0) target = $region45
    $region44: #{vae_forward.1} parent=1 // pred_region
      _
    $region45: #{vae_forward.1} parent=1 // pred_fallthru
      _
    // Predicated region
    $region46: #{vae_forward.1} parent=1 // pred_check
      _
    $region47: #{vae_forward.1} parent=1 // pred_check_branch
      %54 = sbr.rel (0) target = $region49
    $region48: #{vae_forward.1} parent=1 // pred_region
      _
    $region49: #{vae_forward.1} parent=1 // pred_fallthru
      _
    // Predicated region
    $region50: #{vae_forward.1} parent=1 // pred_check
      _
    $region51: #{vae_forward.1} parent=1 // pred_check_branch
      %56 = sbr.rel (0) target = $region53
    $region52: #{vae_forward.1} parent=1 // pred_region
      _
    $region53: #{vae_forward.1} parent=1 // pred_fallthru
      _
    // Predicated region
    $region54: #{vae_forward.1} parent=1 // pred_check
      _
    $region55: #{vae_forward.1} parent=1 // pred_check_branch
      %58 = sbr.rel (0) target = $region57
    $region56: #{vae_forward.1} parent=1 // pred_region
      _
    $region57: #{vae_forward.1} parent=1 // pred_fallthru
      _
    // Predicated region
    $region58: #{vae_forward.1} parent=1 // pred_check
      _
    $region59: #{vae_forward.1} parent=1 // pred_check_branch
      %60 = sbr.rel (0) target = $region61
    $region60: #{vae_forward.1} parent=1 // pred_region
      _
    $region61: #{vae_forward.1} parent=1 // pred_fallthru
      _
    // Predicated region
    $region62: #{vae_forward.1} parent=1 // pred_check
      _
    $region63: #{vae_forward.1} parent=1 // pred_check_branch
      %62 = sbr.rel (0) target = $region65
    $region64: #{vae_forward.1} parent=1 // pred_region
      _
    $region65: #{vae_forward.1} parent=1 // pred_fallthru
      _
    // Predicated region
    $region66: #{vae_forward.1} parent=1 // pred_check
      _
    $region67: #{vae_forward.1} parent=1 // pred_check_branch
      %64 = sbr.rel (0) target = $region69
    $region68: #{vae_forward.1} parent=1 // pred_region
      _
    $region69: #{vae_forward.1} parent=1 // pred_fallthru
      _
    // Predicated region
    $region70: #{vae_forward.1} parent=1 // pred_check
      _
    $region71: #{vae_forward.1} parent=1 // pred_check_branch
      %66 = sbr.rel (0) target = $region73
    $region72: #{vae_forward.1} parent=1 // pred_region
      _
    $region73: #{vae_forward.1} parent=1 // pred_fallthru
      _
    // Predicated region
    $region74: #{vae_forward.1} parent=1 // pred_check
      _
    $region75: #{vae_forward.1} parent=1 // pred_check_branch
      %68 = sbr.rel (0) target = $region77
    $region76: #{vae_forward.1} parent=1 // pred_region
      _
    $region77: #{vae_forward.1} parent=1 // pred_fallthru
      _
    // Predicated region
    $region78: #{vae_forward.1} parent=1 // pred_check
      _
    $region79: #{vae_forward.1} parent=1 // pred_check_branch
      %70 = sbr.rel (0) target = $region81
    $region80: #{vae_forward.1} parent=1 // pred_region
      _
    $region81: #{vae_forward.1} parent=1 // pred_fallthru
      _
    // Predicated region
    $region82: #{vae_forward.1} parent=1 // pred_check
      _
    $region83: #{vae_forward.1} parent=1 // pred_check_branch
      %72 = sbr.rel (0) target = $region85
    $region84: #{vae_forward.1} parent=1 // pred_region
      _
    $region85: #{vae_forward.1} parent=1 // pred_fallthru
      _
    %v73 = vld [vmem:[%s0] sm:$0xff]
    %v74 = vld [vmem:[%s0 + $0x8] sm:$0xff]
    %v75 = vld [vmem:[%s0 + $0x10] sm:$0xff]
    %v76 = vld [vmem:[%s0 + $0x18] sm:$0xff]
    %v77 = vld [vmem:[%s0 + $0x20] sm:$0xff]
    %v78 = vld [vmem:[%s0 + $0x28] sm:$0xff]
    %v79 = vld [vmem:[%s0 + $0x30] sm:$0xff]
    %v80 = vld [vmem:[%s0 + $0x38] sm:$0xff]
    %v81 = vld [vmem:[%s1] sm:$0xff]
    %v82 = vld [vmem:[%s1 + $0x8] sm:$0xff]
    %v83 = vld [vmem:[%s1 + $0x10] sm:$0xff]
    %v84 = vld [vmem:[%s1 + $0x18] sm:$0xff]
    %v85 = vld [vmem:[%s1 + $0x20] sm:$0xff]
    %v86 = vld [vmem:[%s1 + $0x28] sm:$0xff]
    %v87 = vld [vmem:[%s1 + $0x30] sm:$0xff]
    %v88 = vld [vmem:[%s1 + $0x38] sm:$0xff]
    %v89 = vld [vmem:[%s2] sm:$0xff]
    %v90 = vld [vmem:[%s2 + $0x8] sm:$0xff]
    %v91 = vld [vmem:[%s2 + $0x10] sm:$0xff]
    %v92 = vld [vmem:[%s2 + $0x18] sm:$0xff]
    %v93 = vld [vmem:[%s2 + $0x20] sm:$0xff]
    %v94 = vld [vmem:[%s2 + $0x28] sm:$0xff]
    %v95 = vld [vmem:[%s2 + $0x30] sm:$0xff]
    %v96 = vld [vmem:[%s2 + $0x38] sm:$0xff]
    %v97 = vld [vmem:[%s3] sm:$0xff]
    %v98 = vld [vmem:[%s3 + $0x8] sm:$0xff]
    %v99 = vld [vmem:[%s3 + $0x10] sm:$0xff]
    %v100 = vld [vmem:[%s3 + $0x18] sm:$0xff]
    %v101 = vld [vmem:[%s3 + $0x20] sm:$0xff]
    %v102 = vld [vmem:[%s3 + $0x28] sm:$0xff]
    %v103 = vld [vmem:[%s3 + $0x30] sm:$0xff]
    %v104 = vld [vmem:[%s3 + $0x38] sm:$0xff]
    %v105 = vld [vmem:[%s3 + $0x40] sm:$0xff]
    %v106 = vld [vmem:[%s3 + $0x48] sm:$0xff]
    %v107 = vld [vmem:[%s3 + $0x50] sm:$0xff]
    %v108 = vld [vmem:[%s3 + $0x58] sm:$0xff]
    %v109 = vld [vmem:[%s3 + $0x60] sm:$0xff]
    %v110 = vld [vmem:[%s3 + $0x68] sm:$0xff]
    %v111 = vld [vmem:[%s3 + $0x70] sm:$0xff]
    %v112 = vld [vmem:[%s3 + $0x78] sm:$0xff]
    %v113 = vld [vmem:[%s4] sm:$0xff]
    %v114 = vld [vmem:[%s4 + $0x8] sm:$0xff]
    %vm115 = vcmask 130048
    %v117 = vsel %vm115, %v81, 0
    %v120 = vsel %vm115, %v82, 0
    %v123 = vsel %vm115, %v83, 0
    %v126 = vsel %vm115, %v84, 0
    %v129 = vsel %vm115, %v85, 0
    %v132 = vsel %vm115, %v86, 0
    %v135 = vsel %vm115, %v87, 0
    %v138 = vsel %vm115, %v88, 0
    %140 = vmatprep.subr.mxu0 0.0
    %141 = vmatpush1.msra.mxu0 %v113
    %142 = vmatprep.subr.mxu0 0.0
    %143 = vmatpush1.msra.mxu0 %v114
    %144 = vmatprep.subr.mxu0 0.0
    %145 = vmatpush1.msra.mxu0 0.0
    %146 = vmatprep.subr.mxu0 0.0
    %147 = vmatpush1.msra.mxu0 0.0
    %148 = vmatprep.subr.mxu0 0.0
    %149 = vmatpush1.msra.mxu0 0.0
    %150 = vmatprep.subr.mxu0 0.0
    %151 = vmatpush1.msra.mxu0 0.0
    %152 = vmatprep.subr.mxu0 0.0
    %153 = vmatpush1.msra.mxu0 0.0
    %154 = vmatprep.subr.mxu0 0.0
    %155 = vmatpush1.msra.mxu0 0.0
    %156 = vmatprep.subr.mxu0 0.0
    %157 = vmatpush1.msra.mxu0 0.0
    %158 = vmatprep.subr.mxu0 0.0
    %159 = vmatpush1.msra.mxu0 0.0
    %160 = vmatprep.subr.mxu0 0.0
    %161 = vmatpush1.msra.mxu0 0.0
    %162 = vmatprep.subr.mxu0 0.0
    %163 = vmatpush1.msra.mxu0 0.0
    %164 = vmatprep.subr.mxu0 0.0
    %165 = vmatpush1.msra.mxu0 0.0
    %166 = vmatprep.subr.mxu0 0.0
    %167 = vmatpush1.msra.mxu0 0.0
    %168 = vmatprep.subr.mxu0 0.0
    %169 = vmatpush1.msra.mxu0 0.0
    %170 = vmatprep.subr.mxu0 0.0
    %171 = vmatpush1.msra.mxu0 0.0
    %172 = vmatprep.subr.mxu0 0.0
    %173 = vmatpush1.msra.mxu0 0.0
    %174 = vmatprep.subr.mxu0 0.0
    %175 = vmatpush1.msra.mxu0 0.0
    %176 = vmatprep.subr.mxu0 0.0
    %177 = vmatpush1.msra.mxu0 0.0
    %178 = vmatprep.subr.mxu0 0.0
    %179 = vmatpush1.msra.mxu0 0.0
    %180 = vmatprep.subr.mxu0 0.0
    %181 = vmatpush1.msra.mxu0 0.0
    %182 = vmatprep.subr.mxu0 0.0
    %183 = vmatpush1.msra.mxu0 0.0
    %184 = vmatprep.subr.mxu0 0.0
    %185 = vmatpush1.msra.mxu0 0.0
    %186 = vmatprep.subr.mxu0 0.0
    %187 = vmatpush1.msra.mxu0 0.0
    %188 = vmatprep.subr.mxu0 0.0
    %189 = vmatpush1.msra.mxu0 0.0
    %190 = vmatprep.subr.mxu0 0.0
    %191 = vmatpush1.msra.mxu0 0.0
    %192 = vmatprep.subr.mxu0 0.0
    %193 = vmatpush1.msra.mxu0 0.0
    %194 = vmatprep.subr.mxu0 0.0
    %195 = vmatpush1.msra.mxu0 0.0
    %196 = vmatprep.subr.mxu0 0.0
    %197 = vmatpush1.msra.mxu0 0.0
    %198 = vmatprep.subr.mxu0 0.0
    %199 = vmatpush1.msra.mxu0 0.0
    %200 = vmatprep.subr.mxu0 0.0
    %201 = vmatpush1.msra.mxu0 0.0
    %202 = vmatprep.subr.mxu0 0.0
    %203 = vmatpush1.msra.mxu0 0.0
    %204 = vmatprep.mubr.f32.mxu0 0.0
    %205 = vmatmul.mubr.f32.gmra.mrb[0].mxu0 %v117
    %v206 = vpop.f32.mrb[0].mxu0
    %v207 = vadd.f32 0.0, %v206
    %v208 = vpop.f32.mrb[0].mxu0
    %209 = vmatprep.mubr.f32.mxu0 0.0
    %210 = vmatmul.mubr.f32.gmra.mrb[0].mxu0 %v120
    %v211 = vpop.f32.mrb[0].mxu0
    %v212 = vadd.f32 0.0, %v211
    %v213 = vpop.f32.mrb[0].mxu0
    %214 = vmatprep.mubr.f32.mxu0 0.0
    %215 = vmatmul.mubr.f32.gmra.mrb[0].mxu0 %v123
    %v216 = vpop.f32.mrb[0].mxu0
    %v217 = vadd.f32 0.0, %v216
    %v218 = vpop.f32.mrb[0].mxu0
    %219 = vmatprep.mubr.f32.mxu0 0.0
    %220 = vmatmul.mubr.f32.gmra.mrb[0].mxu0 %v126
    %v221 = vpop.f32.mrb[0].mxu0
    %v222 = vadd.f32 0.0, %v221
    %v223 = vpop.f32.mrb[0].mxu0
    %224 = vmatprep.mubr.f32.mxu0 0.0
    %225 = vmatmul.mubr.f32.gmra.mrb[0].mxu0 %v129
    %v226 = vpop.f32.mrb[0].mxu0
    %v227 = vadd.f32 0.0, %v226
    %v228 = vpop.f32.mrb[0].mxu0
    %229 = vmatprep.mubr.f32.mxu0 0.0
    %230 = vmatmul.mubr.f32.gmra.mrb[0].mxu0 %v132
    %v231 = vpop.f32.mrb[0].mxu0
    %v232 = vadd.f32 0.0, %v231
    %v233 = vpop.f32.mrb[0].mxu0
    %234 = vmatprep.mubr.f32.mxu0 0.0
    %235 = vmatmul.mubr.f32.gmra.mrb[0].mxu0 %v135
    %v236 = vpop.f32.mrb[0].mxu0
    %v237 = vadd.f32 0.0, %v236
    %v238 = vpop.f32.mrb[0].mxu0
    %239 = vmatprep.mubr.f32.mxu0 0.0
    %240 = vmatmul.mubr.f32.gmra.mrb[0].mxu0 %v138
    %v241 = vpop.f32.mrb[0].mxu0
    %v242 = vadd.f32 0.0, %v241
    %v243 = vpop.f32.mrb[0].mxu0
    %244 = vdwg.mxu0
    %245 = vmatprep.subr.mxu0 0.0
    %246 = vmatpush1.msra.mxu0 %v97
    %247 = vmatprep.subr.mxu0 0.0
    %248 = vmatpush1.msra.mxu0 %v98
    %249 = vmatprep.subr.mxu0 0.0
    %250 = vmatpush1.msra.mxu0 %v99
    %251 = vmatprep.subr.mxu0 0.0
    %252 = vmatpush1.msra.mxu0 %v100
    %253 = vmatprep.subr.mxu0 0.0
    %254 = vmatpush1.msra.mxu0 %v101
    %255 = vmatprep.subr.mxu0 0.0
    %256 = vmatpush1.msra.mxu0 %v102
    %257 = vmatprep.subr.mxu0 0.0
    %258 = vmatpush1.msra.mxu0 %v103
    %259 = vmatprep.subr.mxu0 0.0
    %260 = vmatpush1.msra.mxu0 %v104
    %261 = vmatprep.subr.mxu0 0.0
    %262 = vmatpush1.msra.mxu0 %v105
    %263 = vmatprep.subr.mxu0 0.0
    %264 = vmatpush1.msra.mxu0 %v106
    %265 = vmatprep.subr.mxu0 0.0
    %266 = vmatpush1.msra.mxu0 %v107
    %267 = vmatprep.subr.mxu0 0.0
    %268 = vmatpush1.msra.mxu0 %v108
    %269 = vmatprep.subr.mxu0 0.0
    %270 = vmatpush1.msra.mxu0 %v109
    %271 = vmatprep.subr.mxu0 0.0
    %272 = vmatpush1.msra.mxu0 %v110
    %273 = vmatprep.subr.mxu0 0.0
    %274 = vmatpush1.msra.mxu0 %v111
    %275 = vmatprep.subr.mxu0 0.0
    %276 = vmatpush1.msra.mxu0 %v112
    %277 = vmatprep.subr.mxu0 0.0
    %278 = vmatpush1.msra.mxu0 0.0
    %279 = vmatprep.subr.mxu0 0.0
    %280 = vmatpush1.msra.mxu0 0.0
    %281 = vmatprep.subr.mxu0 0.0
    %282 = vmatpush1.msra.mxu0 0.0
    %283 = vmatprep.subr.mxu0 0.0
    %284 = vmatpush1.msra.mxu0 0.0
    %285 = vmatprep.subr.mxu0 0.0
    %286 = vmatpush1.msra.mxu0 0.0
    %287 = vmatprep.subr.mxu0 0.0
    %288 = vmatpush1.msra.mxu0 0.0
    %289 = vmatprep.subr.mxu0 0.0
    %290 = vmatpush1.msra.mxu0 0.0
    %291 = vmatprep.subr.mxu0 0.0
    %292 = vmatpush1.msra.mxu0 0.0
    %293 = vmatprep.subr.mxu0 0.0
    %294 = vmatpush1.msra.mxu0 0.0
    %295 = vmatprep.subr.mxu0 0.0
    %296 = vmatpush1.msra.mxu0 0.0
    %297 = vmatprep.subr.mxu0 0.0
    %298 = vmatpush1.msra.mxu0 0.0
    %299 = vmatprep.subr.mxu0 0.0
    %300 = vmatpush1.msra.mxu0 0.0
    %301 = vmatprep.subr.mxu0 0.0
    %302 = vmatpush1.msra.mxu0 0.0
    %303 = vmatprep.subr.mxu0 0.0
    %304 = vmatpush1.msra.mxu0 0.0
    %305 = vmatprep.subr.mxu0 0.0
    %306 = vmatpush1.msra.mxu0 0.0
    %307 = vmatprep.subr.mxu0 0.0
    %308 = vmatpush1.msra.mxu0 0.0
    %309 = vmatprep.mubr.f32.mxu0 0.0
    %310 = vmatmul.mubr.f32.gmra.mrb[0].mxu0 %v73
    %v311 = vpop.f32.mrb[0].mxu0
    %v312 = vadd.f32 %v207, %v311
    %v313 = vpop.f32.mrb[0].mxu0
    %314 = vmatprep.mubr.f32.mxu0 0.0
    %315 = vmatmul.mubr.f32.gmra.mrb[0].mxu0 %v74
    %v316 = vpop.f32.mrb[0].mxu0
    %v317 = vadd.f32 %v212, %v316
    %v318 = vpop.f32.mrb[0].mxu0
    %319 = vmatprep.mubr.f32.mxu0 0.0
    %320 = vmatmul.mubr.f32.gmra.mrb[0].mxu0 %v75
    %v321 = vpop.f32.mrb[0].mxu0
    %v322 = vadd.f32 %v217, %v321
    %v323 = vpop.f32.mrb[0].mxu0
    %324 = vmatprep.mubr.f32.mxu0 0.0
    %325 = vmatmul.mubr.f32.gmra.mrb[0].mxu0 %v76
    %v326 = vpop.f32.mrb[0].mxu0
    %v327 = vadd.f32 %v222, %v326
    %v328 = vpop.f32.mrb[0].mxu0
    %329 = vmatprep.mubr.f32.mxu0 0.0
    %330 = vmatmul.mubr.f32.gmra.mrb[0].mxu0 %v77
    %v331 = vpop.f32.mrb[0].mxu0
    %v332 = vadd.f32 %v227, %v331
    %v333 = vpop.f32.mrb[0].mxu0
    %334 = vmatprep.mubr.f32.mxu0 0.0
    %335 = vmatmul.mubr.f32.gmra.mrb[0].mxu0 %v78
    %v336 = vpop.f32.mrb[0].mxu0
    %v337 = vadd.f32 %v232, %v336
    %v338 = vpop.f32.mrb[0].mxu0
    %339 = vmatprep.mubr.f32.mxu0 0.0
    %340 = vmatmul.mubr.f32.gmra.mrb[0].mxu0 %v79
    %v341 = vpop.f32.mrb[0].mxu0
    %v342 = vadd.f32 %v237, %v341
    %v343 = vpop.f32.mrb[0].mxu0
    %344 = vmatprep.mubr.f32.mxu0 0.0
    %345 = vmatmul.mubr.f32.gmra.mrb[0].mxu0 %v80
    %v346 = vpop.f32.mrb[0].mxu0
    %v347 = vadd.f32 %v242, %v346
    %v348 = vpop.f32.mrb[0].mxu0
    %349 = vdwg.mxu0
    %v350 = vld [vmem:[%s5] sm:$0x1]
    %v352 = vlaneseq
    %v353 = vshrl.u32 %v352, 7
    %v354 = vsub.s32 0, %v353
    %v355 = vrot.slane %v350, %v354
    %v357 = vadd.f32 %v312, %v355
    %v358 = vadd.f32 %v317, %v355
    %v359 = vadd.f32 %v322, %v355
    %v360 = vadd.f32 %v327, %v355
    %v361 = vadd.f32 %v332, %v355
    %v362 = vadd.f32 %v337, %v355
    %v363 = vadd.f32 %v342, %v355
    %v364 = vadd.f32 %v347, %v355
    %v365 = vmul.f32 %v357, 0.7
    %v366 = vmul.f32 %v358, 0.7
    %v367 = vmul.f32 %v359, 0.7
    %v368 = vmul.f32 %v360, 0.7
    %v369 = vmul.f32 %v361, 0.7
    %v370 = vmul.f32 %v362, 0.7
    %v371 = vmul.f32 %v363, 0.7
    %v372 = vmul.f32 %v364, 0.7
    %v373 = vmax.f32 %v357, %v365
    %v374 = vmax.f32 %v358, %v366
    %v375 = vmax.f32 %v359, %v367
    %v376 = vmax.f32 %v360, %v368
    %v377 = vmax.f32 %v361, %v369
    %v378 = vmax.f32 %v362, %v370
    %v379 = vmax.f32 %v363, %v371
    %v380 = vmax.f32 %v364, %v372
    %v381 = vld [vmem:[%s6] sm:$0xff]
    %v382 = vld [vmem:[%s6 + $0x8] sm:$0xff]
    %v383 = vld [vmem:[%s6 + $0x10] sm:$0xff]
    %v384 = vld [vmem:[%s6 + $0x18] sm:$0xff]
    %v385 = vld [vmem:[%s6 + $0x20] sm:$0xff]
    %v386 = vld [vmem:[%s6 + $0x28] sm:$0xff]
    %v387 = vld [vmem:[%s6 + $0x30] sm:$0xff]
    %v388 = vld [vmem:[%s6 + $0x38] sm:$0xff]
    %v389 = vld [vmem:[%s6 + $0x40] sm:$0xff]
    %v390 = vld [vmem:[%s6 + $0x48] sm:$0xff]
    %v391 = vld [vmem:[%s6 + $0x50] sm:$0xff]
    %v392 = vld [vmem:[%s6 + $0x58] sm:$0xff]
    %v393 = vld [vmem:[%s6 + $0x60] sm:$0xff]
    %v394 = vld [vmem:[%s6 + $0x68] sm:$0xff]
    %v395 = vld [vmem:[%s6 + $0x70] sm:$0xff]
    %v396 = vld [vmem:[%s6 + $0x78] sm:$0xff]
    %v397 = vld [vmem:[%s7] sm:$0x1]
    %v399 = vlaneseq
    %v400 = vshrl.u32 %v399, 7
    %v401 = vsub.s32 0, %v400
    %v402 = vrot.slane %v397, %v401
    %404 = vmatprep.subr.mxu0 0.0
    %405 = vmatpush1.msra.mxu0 %v381
    %406 = vmatprep.subr.mxu0 0.0
    %407 = vmatpush1.msra.mxu0 %v382
    %408 = vmatprep.subr.mxu0 0.0
    %409 = vmatpush1.msra.mxu0 %v383
    %410 = vmatprep.subr.mxu0 0.0
    %411 = vmatpush1.msra.mxu0 %v384
    %412 = vmatprep.subr.mxu0 0.0
    %413 = vmatpush1.msra.mxu0 %v385
    %414 = vmatprep.subr.mxu0 0.0
    %415 = vmatpush1.msra.mxu0 %v386
    %416 = vmatprep.subr.mxu0 0.0
    %417 = vmatpush1.msra.mxu0 %v387
    %418 = vmatprep.subr.mxu0 0.0
    %419 = vmatpush1.msra.mxu0 %v388
    %420 = vmatprep.subr.mxu0 0.0
    %421 = vmatpush1.msra.mxu0 %v389
    %422 = vmatprep.subr.mxu0 0.0
    %423 = vmatpush1.msra.mxu0 %v390
    %424 = vmatprep.subr.mxu0 0.0
    %425 = vmatpush1.msra.mxu0 %v391
    %426 = vmatprep.subr.mxu0 0.0
    %427 = vmatpush1.msra.mxu0 %v392
    %428 = vmatprep.subr.mxu0 0.0
    %429 = vmatpush1.msra.mxu0 %v393
    %430 = vmatprep.subr.mxu0 0.0
    %431 = vmatpush1.msra.mxu0 %v394
    %432 = vmatprep.subr.mxu0 0.0
    %433 = vmatpush1.msra.mxu0 %v395
    %434 = vmatprep.subr.mxu0 0.0
    %435 = vmatpush1.msra.mxu0 %v396
    %436 = vmatprep.subr.mxu0 0.0
    %437 = vmatpush1.msra.mxu0 0.0
    %438 = vmatprep.subr.mxu0 0.0
    %439 = vmatpush1.msra.mxu0 0.0
    %440 = vmatprep.subr.mxu0 0.0
    %441 = vmatpush1.msra.mxu0 0.0
    %442 = vmatprep.subr.mxu0 0.0
    %443 = vmatpush1.msra.mxu0 0.0
    %444 = vmatprep.subr.mxu0 0.0
    %445 = vmatpush1.msra.mxu0 0.0
    %446 = vmatprep.subr.mxu0 0.0
    %447 = vmatpush1.msra.mxu0 0.0
    %448 = vmatprep.subr.mxu0 0.0
    %449 = vmatpush1.msra.mxu0 0.0
    %450 = vmatprep.subr.mxu0 0.0
    %451 = vmatpush1.msra.mxu0 0.0
    %452 = vmatprep.subr.mxu0 0.0
    %453 = vmatpush1.msra.mxu0 0.0
    %454 = vmatprep.subr.mxu0 0.0
    %455 = vmatpush1.msra.mxu0 0.0
    %456 = vmatprep.subr.mxu0 0.0
    %457 = vmatpush1.msra.mxu0 0.0
    %458 = vmatprep.subr.mxu0 0.0
    %459 = vmatpush1.msra.mxu0 0.0
    %460 = vmatprep.subr.mxu0 0.0
    %461 = vmatpush1.msra.mxu0 0.0
    %462 = vmatprep.subr.mxu0 0.0
    %463 = vmatpush1.msra.mxu0 0.0
    %464 = vmatprep.subr.mxu0 0.0
    %465 = vmatpush1.msra.mxu0 0.0
    %466 = vmatprep.subr.mxu0 0.0
    %467 = vmatpush1.msra.mxu0 0.0
    %468 = vmatprep.mubr.f32.mxu0 0.0
    %469 = vmatmul.mubr.f32.gmra.mrb[0].mxu0 %v373
    %v470 = vpop.f32.mrb[0].mxu0
    %v471 = vadd.f32 %v402, %v470
    %v472 = vpop.f32.mrb[0].mxu0
    %473 = vmatprep.mubr.f32.mxu0 0.0
    %474 = vmatmul.mubr.f32.gmra.mrb[0].mxu0 %v374
    %v475 = vpop.f32.mrb[0].mxu0
    %v476 = vadd.f32 %v402, %v475
    %v477 = vpop.f32.mrb[0].mxu0
    %478 = vmatprep.mubr.f32.mxu0 0.0
    %479 = vmatmul.mubr.f32.gmra.mrb[0].mxu0 %v375
    %v480 = vpop.f32.mrb[0].mxu0
    %v481 = vadd.f32 %v402, %v480
    %v482 = vpop.f32.mrb[0].mxu0
    %483 = vmatprep.mubr.f32.mxu0 0.0
    %484 = vmatmul.mubr.f32.gmra.mrb[0].mxu0 %v376
    %v485 = vpop.f32.mrb[0].mxu0
    %v486 = vadd.f32 %v402, %v485
    %v487 = vpop.f32.mrb[0].mxu0
    %488 = vmatprep.mubr.f32.mxu0 0.0
    %489 = vmatmul.mubr.f32.gmra.mrb[0].mxu0 %v377
    %v490 = vpop.f32.mrb[0].mxu0
    %v491 = vadd.f32 %v402, %v490
    %v492 = vpop.f32.mrb[0].mxu0
    %493 = vmatprep.mubr.f32.mxu0 0.0
    %494 = vmatmul.mubr.f32.gmra.mrb[0].mxu0 %v378
    %v495 = vpop.f32.mrb[0].mxu0
    %v496 = vadd.f32 %v402, %v495
    %v497 = vpop.f32.mrb[0].mxu0
    %498 = vmatprep.mubr.f32.mxu0 0.0
    %499 = vmatmul.mubr.f32.gmra.mrb[0].mxu0 %v379
    %v500 = vpop.f32.mrb[0].mxu0
    %v501 = vadd.f32 %v402, %v500
    %v502 = vpop.f32.mrb[0].mxu0
    %503 = vmatprep.mubr.f32.mxu0 0.0
    %504 = vmatmul.mubr.f32.gmra.mrb[0].mxu0 %v380
    %v505 = vpop.f32.mrb[0].mxu0
    %v506 = vadd.f32 %v402, %v505
    %v507 = vpop.f32.mrb[0].mxu0
    %508 = vdwg.mxu0
    %v509 = vmul.f32 %v471, 0.7
    %v510 = vmul.f32 %v476, 0.7
    %v511 = vmul.f32 %v481, 0.7
    %v512 = vmul.f32 %v486, 0.7
    %v513 = vmul.f32 %v491, 0.7
    %v514 = vmul.f32 %v496, 0.7
    %v515 = vmul.f32 %v501, 0.7
    %v516 = vmul.f32 %v506, 0.7
    %v517 = vmax.f32 %v471, %v509
    %v518 = vmax.f32 %v476, %v510
    %v519 = vmax.f32 %v481, %v511
    %v520 = vmax.f32 %v486, %v512
    %v521 = vmax.f32 %v491, %v513
    %v522 = vmax.f32 %v496, %v514
    %v523 = vmax.f32 %v501, %v515
    %v524 = vmax.f32 %v506, %v516
    %v525 = vld [vmem:[%s8] sm:$0xff]
    %v526 = vld [vmem:[%s8 + $0x8] sm:$0xff]
    %v527 = vld [vmem:[%s8 + $0x10] sm:$0xff]
    %v528 = vld [vmem:[%s8 + $0x18] sm:$0xff]
    %v529 = vld [vmem:[%s8 + $0x20] sm:$0xff]
    %v530 = vld [vmem:[%s8 + $0x28] sm:$0xff]
    %v531 = vld [vmem:[%s8 + $0x30] sm:$0xff]
    %v532 = vld [vmem:[%s8 + $0x38] sm:$0xff]
    %v533 = vld [vmem:[%s8 + $0x40] sm:$0xff]
    %v534 = vld [vmem:[%s8 + $0x48] sm:$0xff]
    %v535 = vld [vmem:[%s8 + $0x50] sm:$0xff]
    %v536 = vld [vmem:[%s8 + $0x58] sm:$0xff]
    %v537 = vld [vmem:[%s8 + $0x60] sm:$0xff]
    %v538 = vld [vmem:[%s8 + $0x68] sm:$0xff]
    %v539 = vld [vmem:[%s8 + $0x70] sm:$0xff]
    %v540 = vld [vmem:[%s8 + $0x78] sm:$0xff]
    %v541 = vld [vmem:[%s9] sm:$0x1]
    %v543 = vlaneseq
    %v544 = vshrl.u32 %v543, 7
    %v545 = vsub.s32 0, %v544
    %v546 = vrot.slane %v541, %v545
    %548 = vmatprep.subr.mxu0 0.0
    %549 = vmatpush1.msra.mxu0 %v525
    %550 = vmatprep.subr.mxu0 0.0
    %551 = vmatpush1.msra.mxu0 %v526
    %552 = vmatprep.subr.mxu0 0.0
    %553 = vmatpush1.msra.mxu0 %v527
    %554 = vmatprep.subr.mxu0 0.0
    %555 = vmatpush1.msra.mxu0 %v528
    %556 = vmatprep.subr.mxu0 0.0
    %557 = vmatpush1.msra.mxu0 %v529
    %558 = vmatprep.subr.mxu0 0.0
    %559 = vmatpush1.msra.mxu0 %v530
    %560 = vmatprep.subr.mxu0 0.0
    %561 = vmatpush1.msra.mxu0 %v531
    %562 = vmatprep.subr.mxu0 0.0
    %563 = vmatpush1.msra.mxu0 %v532
    %564 = vmatprep.subr.mxu0 0.0
    %565 = vmatpush1.msra.mxu0 %v533
    %566 = vmatprep.subr.mxu0 0.0
    %567 = vmatpush1.msra.mxu0 %v534
    %568 = vmatprep.subr.mxu0 0.0
    %569 = vmatpush1.msra.mxu0 %v535
    %570 = vmatprep.subr.mxu0 0.0
    %571 = vmatpush1.msra.mxu0 %v536
    %572 = vmatprep.subr.mxu0 0.0
    %573 = vmatpush1.msra.mxu0 %v537
    %574 = vmatprep.subr.mxu0 0.0
    %575 = vmatpush1.msra.mxu0 %v538
    %576 = vmatprep.subr.mxu0 0.0
    %577 = vmatpush1.msra.mxu0 %v539
    %578 = vmatprep.subr.mxu0 0.0
    %579 = vmatpush1.msra.mxu0 %v540
    %580 = vmatprep.subr.mxu0 0.0
    %581 = vmatpush1.msra.mxu0 0.0
    %582 = vmatprep.subr.mxu0 0.0
    %583 = vmatpush1.msra.mxu0 0.0
    %584 = vmatprep.subr.mxu0 0.0
    %585 = vmatpush1.msra.mxu0 0.0
    %586 = vmatprep.subr.mxu0 0.0
    %587 = vmatpush1.msra.mxu0 0.0
    %588 = vmatprep.subr.mxu0 0.0
    %589 = vmatpush1.msra.mxu0 0.0
    %590 = vmatprep.subr.mxu0 0.0
    %591 = vmatpush1.msra.mxu0 0.0
    %592 = vmatprep.subr.mxu0 0.0
    %593 = vmatpush1.msra.mxu0 0.0
    %594 = vmatprep.subr.mxu0 0.0
    %595 = vmatpush1.msra.mxu0 0.0
    %596 = vmatprep.subr.mxu0 0.0
    %597 = vmatpush1.msra.mxu0 0.0
    %598 = vmatprep.subr.mxu0 0.0
    %599 = vmatpush1.msra.mxu0 0.0
    %600 = vmatprep.subr.mxu0 0.0
    %601 = vmatpush1.msra.mxu0 0.0
    %602 = vmatprep.subr.mxu0 0.0
    %603 = vmatpush1.msra.mxu0 0.0
    %604 = vmatprep.subr.mxu0 0.0
    %605 = vmatpush1.msra.mxu0 0.0
    %606 = vmatprep.subr.mxu0 0.0
    %607 = vmatpush1.msra.mxu0 0.0
    %608 = vmatprep.subr.mxu0 0.0
    %609 = vmatpush1.msra.mxu0 0.0
    %610 = vmatprep.subr.mxu0 0.0
    %611 = vmatpush1.msra.mxu0 0.0
    %612 = vmatprep.mubr.f32.mxu0 0.0
    %613 = vmatmul.mubr.f32.gmra.mrb[0].mxu0 %v517
    %v614 = vpop.f32.mrb[0].mxu0
    %v615 = vadd.f32 %v546, %v614
    %v616 = vpop.f32.mrb[0].mxu0
    %617 = vmatprep.mubr.f32.mxu0 0.0
    %618 = vmatmul.mubr.f32.gmra.mrb[0].mxu0 %v518
    %v619 = vpop.f32.mrb[0].mxu0
    %v620 = vadd.f32 %v546, %v619
    %v621 = vpop.f32.mrb[0].mxu0
    %622 = vmatprep.mubr.f32.mxu0 0.0
    %623 = vmatmul.mubr.f32.gmra.mrb[0].mxu0 %v519
    %v624 = vpop.f32.mrb[0].mxu0
    %v625 = vadd.f32 %v546, %v624
    %v626 = vpop.f32.mrb[0].mxu0
    %627 = vmatprep.mubr.f32.mxu0 0.0
    %628 = vmatmul.mubr.f32.gmra.mrb[0].mxu0 %v520
    %v629 = vpop.f32.mrb[0].mxu0
    %v630 = vadd.f32 %v546, %v629
    %v631 = vpop.f32.mrb[0].mxu0
    %632 = vmatprep.mubr.f32.mxu0 0.0
    %633 = vmatmul.mubr.f32.gmra.mrb[0].mxu0 %v521
    %v634 = vpop.f32.mrb[0].mxu0
    %v635 = vadd.f32 %v546, %v634
    %v636 = vpop.f32.mrb[0].mxu0
    %637 = vmatprep.mubr.f32.mxu0 0.0
    %638 = vmatmul.mubr.f32.gmra.mrb[0].mxu0 %v522
    %v639 = vpop.f32.mrb[0].mxu0
    %v640 = vadd.f32 %v546, %v639
    %v641 = vpop.f32.mrb[0].mxu0
    %642 = vmatprep.mubr.f32.mxu0 0.0
    %643 = vmatmul.mubr.f32.gmra.mrb[0].mxu0 %v523
    %v644 = vpop.f32.mrb[0].mxu0
    %v645 = vadd.f32 %v546, %v644
    %v646 = vpop.f32.mrb[0].mxu0
    %647 = vmatprep.mubr.f32.mxu0 0.0
    %648 = vmatmul.mubr.f32.gmra.mrb[0].mxu0 %v524
    %v649 = vpop.f32.mrb[0].mxu0
    %v650 = vadd.f32 %v546, %v649
    %v651 = vpop.f32.mrb[0].mxu0
    %652 = vdwg.mxu0
    %v653 = vld [vmem:[%s10] sm:$0xff]
    %v654 = vld [vmem:[%s10 + $0x8] sm:$0xff]
    %v655 = vld [vmem:[%s10 + $0x10] sm:$0xff]
    %v656 = vld [vmem:[%s10 + $0x18] sm:$0xff]
    %v657 = vld [vmem:[%s10 + $0x20] sm:$0xff]
    %v658 = vld [vmem:[%s10 + $0x28] sm:$0xff]
    %v659 = vld [vmem:[%s10 + $0x30] sm:$0xff]
    %v660 = vld [vmem:[%s10 + $0x38] sm:$0xff]
    %v661 = vld [vmem:[%s11] sm:$0x1]
    %v663 = vlaneseq
    %v664 = vshrl.u32 %v663, 7
    %v665 = vsub.s32 0, %v664
    %v666 = vrot.slane %v661, %v665
    %vm668 = vcmask 523264
    %v670 = vsel %vm668, %v615, 0
    %v673 = vsel %vm668, %v620, 0
    %v676 = vsel %vm668, %v625, 0
    %v679 = vsel %vm668, %v630, 0
    %v682 = vsel %vm668, %v635, 0
    %v685 = vsel %vm668, %v640, 0
    %v688 = vsel %vm668, %v645, 0
    %v691 = vsel %vm668, %v650, 0
    %693 = vmatprep.subr.mxu0 0.0
    %694 = vmatpush1.msra.mxu0 %v653
    %695 = vmatprep.subr.mxu0 0.0
    %696 = vmatpush1.msra.mxu0 %v654
    %697 = vmatprep.subr.mxu0 0.0
    %698 = vmatpush1.msra.mxu0 %v655
    %699 = vmatprep.subr.mxu0 0.0
    %700 = vmatpush1.msra.mxu0 %v656
    %701 = vmatprep.subr.mxu0 0.0
    %702 = vmatpush1.msra.mxu0 %v657
    %703 = vmatprep.subr.mxu0 0.0
    %704 = vmatpush1.msra.mxu0 %v658
    %705 = vmatprep.subr.mxu0 0.0
    %706 = vmatpush1.msra.mxu0 %v659
    %707 = vmatprep.subr.mxu0 0.0
    %708 = vmatpush1.msra.mxu0 %v660
    %709 = vmatprep.subr.mxu0 0.0
    %710 = vmatpush1.msra.mxu0 0.0
    %711 = vmatprep.subr.mxu0 0.0
    %712 = vmatpush1.msra.mxu0 0.0
    %713 = vmatprep.subr.mxu0 0.0
    %714 = vmatpush1.msra.mxu0 0.0
    %715 = vmatprep.subr.mxu0 0.0
    %716 = vmatpush1.msra.mxu0 0.0
    %717 = vmatprep.subr.mxu0 0.0
    %718 = vmatpush1.msra.mxu0 0.0
    %719 = vmatprep.subr.mxu0 0.0
    %720 = vmatpush1.msra.mxu0 0.0
    %721 = vmatprep.subr.mxu0 0.0
    %722 = vmatpush1.msra.mxu0 0.0
    %723 = vmatprep.subr.mxu0 0.0
    %724 = vmatpush1.msra.mxu0 0.0
    %725 = vmatprep.subr.mxu0 0.0
    %726 = vmatpush1.msra.mxu0 0.0
    %727 = vmatprep.subr.mxu0 0.0
    %728 = vmatpush1.msra.mxu0 0.0
    %729 = vmatprep.subr.mxu0 0.0
    %730 = vmatpush1.msra.mxu0 0.0
    %731 = vmatprep.subr.mxu0 0.0
    %732 = vmatpush1.msra.mxu0 0.0
    %733 = vmatprep.subr.mxu0 0.0
    %734 = vmatpush1.msra.mxu0 0.0
    %735 = vmatprep.subr.mxu0 0.0
    %736 = vmatpush1.msra.mxu0 0.0
    %737 = vmatprep.subr.mxu0 0.0
    %738 = vmatpush1.msra.mxu0 0.0
    %739 = vmatprep.subr.mxu0 0.0
    %740 = vmatpush1.msra.mxu0 0.0
    %741 = vmatprep.subr.mxu0 0.0
    %742 = vmatpush1.msra.mxu0 0.0
    %743 = vmatprep.subr.mxu0 0.0
    %744 = vmatpush1.msra.mxu0 0.0
    %745 = vmatprep.subr.mxu0 0.0
    %746 = vmatpush1.msra.mxu0 0.0
    %747 = vmatprep.subr.mxu0 0.0
    %748 = vmatpush1.msra.mxu0 0.0
    %749 = vmatprep.subr.mxu0 0.0
    %750 = vmatpush1.msra.mxu0 0.0
    %751 = vmatprep.subr.mxu0 0.0
    %752 = vmatpush1.msra.mxu0 0.0
    %753 = vmatprep.subr.mxu0 0.0
    %754 = vmatpush1.msra.mxu0 0.0
    %755 = vmatprep.subr.mxu0 0.0
    %756 = vmatpush1.msra.mxu0 0.0
    %757 = vmatprep.mubr.f32.mxu0 0.0
    %758 = vmatmul.mubr.f32.gmra.mrb[0].mxu0 %v670
    %v759 = vpop.f32.mrb[0].mxu0
    %v760 = vadd.f32 %v666, %v759
    %v761 = vpop.f32.mrb[0].mxu0
    %762 = vmatprep.mubr.f32.mxu0 0.0
    %763 = vmatmul.mubr.f32.gmra.mrb[0].mxu0 %v673
    %v764 = vpop.f32.mrb[0].mxu0
    %v765 = vadd.f32 %v666, %v764
    %v766 = vpop.f32.mrb[0].mxu0
    %767 = vmatprep.mubr.f32.mxu0 0.0
    %768 = vmatmul.mubr.f32.gmra.mrb[0].mxu0 %v676
    %v769 = vpop.f32.mrb[0].mxu0
    %v770 = vadd.f32 %v666, %v769
    %v771 = vpop.f32.mrb[0].mxu0
    %772 = vmatprep.mubr.f32.mxu0 0.0
    %773 = vmatmul.mubr.f32.gmra.mrb[0].mxu0 %v679
    %v774 = vpop.f32.mrb[0].mxu0
    %v775 = vadd.f32 %v666, %v774
    %v776 = vpop.f32.mrb[0].mxu0
    %777 = vmatprep.mubr.f32.mxu0 0.0
    %778 = vmatmul.mubr.f32.gmra.mrb[0].mxu0 %v682
    %v779 = vpop.f32.mrb[0].mxu0
    %v780 = vadd.f32 %v666, %v779
    %v781 = vpop.f32.mrb[0].mxu0
    %782 = vmatprep.mubr.f32.mxu0 0.0
    %783 = vmatmul.mubr.f32.gmra.mrb[0].mxu0 %v685
    %v784 = vpop.f32.mrb[0].mxu0
    %v785 = vadd.f32 %v666, %v784
    %v786 = vpop.f32.mrb[0].mxu0
    %787 = vmatprep.mubr.f32.mxu0 0.0
    %788 = vmatmul.mubr.f32.gmra.mrb[0].mxu0 %v688
    %v789 = vpop.f32.mrb[0].mxu0
    %v790 = vadd.f32 %v666, %v789
    %v791 = vpop.f32.mrb[0].mxu0
    %792 = vmatprep.mubr.f32.mxu0 0.0
    %793 = vmatmul.mubr.f32.gmra.mrb[0].mxu0 %v691
    %v794 = vpop.f32.mrb[0].mxu0
    %v795 = vadd.f32 %v666, %v794
    %v796 = vpop.f32.mrb[0].mxu0
    %797 = vdwg.mxu0
    %v798 = vmax.f32 %v760, 0.0
    %v799 = vmax.f32 %v765, 0.0
    %v800 = vmax.f32 %v770, 0.0
    %v801 = vmax.f32 %v775, 0.0
    %v802 = vmax.f32 %v780, 0.0
    %v803 = vmax.f32 %v785, 0.0
    %v804 = vmax.f32 %v790, 0.0
    %v805 = vmax.f32 %v795, 0.0
    %v806 = vand.u32 2147483647, %v760
    %v807 = vand.u32 2147483647, %v765
    %v808 = vand.u32 2147483647, %v770
    %v809 = vand.u32 2147483647, %v775
    %v810 = vand.u32 2147483647, %v780
    %v811 = vand.u32 2147483647, %v785
    %v812 = vand.u32 2147483647, %v790
    %v813 = vand.u32 2147483647, %v795
    %v814 = vsub.f32 0.0, %v806
    %v815 = vsub.f32 0.0, %v807
    %v816 = vsub.f32 0.0, %v808
    %v817 = vsub.f32 0.0, %v809
    %v818 = vsub.f32 0.0, %v810
    %v819 = vsub.f32 0.0, %v811
    %v820 = vsub.f32 0.0, %v812
    %v821 = vsub.f32 0.0, %v813
    %v822 = vmul.f32 %v814, 1.442695
    %v823 = vpow.pop %v822
    %v824 = vmul.f32 %v815, 1.442695
    %v825 = vpow.pop %v824
    %v826 = vmul.f32 %v816, 1.442695
    %v827 = vpow.pop %v826
    %v828 = vmul.f32 %v817, 1.442695
    %v829 = vpow.pop %v828
    %v830 = vmul.f32 %v818, 1.442695
    %v831 = vpow.pop %v830
    %v832 = vmul.f32 %v819, 1.442695
    %v833 = vpow.pop %v832
    %v834 = vmul.f32 %v820, 1.442695
    %v835 = vpow.pop %v834
    %v836 = vmul.f32 %v821, 1.442695
    %v837 = vpow.pop %v836
    %v838 = vadd.f32 %v823, 1.0
    %v839 = vlog2.pop %v838
    %v840 = vmul.f32 %v839, 0.6931472
    %v841 = vmul.f32 -0.5, %v823
    %v842 = vadd.f32 %v841, 1.0
    %v843 = vmul.f32 %v842, %v823
    %v844 = vand.u32 2147483647, %v823
    %vm845 = vcmp.lt.f32.partialorder %v844, 0.0004427343
    %v846 = vsel %vm845, %v843, %v840
    %v847 = vadd.f32 %v825, 1.0
    %v848 = vlog2.pop %v847
    %v849 = vmul.f32 %v848, 0.6931472
    %v850 = vmul.f32 -0.5, %v825
    %v851 = vadd.f32 %v850, 1.0
    %v852 = vmul.f32 %v851, %v825
    %v853 = vand.u32 2147483647, %v825
    %vm854 = vcmp.lt.f32.partialorder %v853, 0.0004427343
    %v855 = vsel %vm854, %v852, %v849
    %v856 = vadd.f32 %v827, 1.0
    %v857 = vlog2.pop %v856
    %v858 = vmul.f32 %v857, 0.6931472
    %v859 = vmul.f32 -0.5, %v827
    %v860 = vadd.f32 %v859, 1.0
    %v861 = vmul.f32 %v860, %v827
    %v862 = vand.u32 2147483647, %v827
    %vm863 = vcmp.lt.f32.partialorder %v862, 0.0004427343
    %v864 = vsel %vm863, %v861, %v858
    %v865 = vadd.f32 %v829, 1.0
    %v866 = vlog2.pop %v865
    %v867 = vmul.f32 %v866, 0.6931472
    %v868 = vmul.f32 -0.5, %v829
    %v869 = vadd.f32 %v868, 1.0
    %v870 = vmul.f32 %v869, %v829
    %v871 = vand.u32 2147483647, %v829
    %vm872 = vcmp.lt.f32.partialorder %v871, 0.0004427343
    %v873 = vsel %vm872, %v870, %v867
    %v874 = vadd.f32 %v831, 1.0
    %v875 = vlog2.pop %v874
    %v876 = vmul.f32 %v875, 0.6931472
    %v877 = vmul.f32 -0.5, %v831
    %v878 = vadd.f32 %v877, 1.0
    %v879 = vmul.f32 %v878, %v831
    %v880 = vand.u32 2147483647, %v831
    %vm881 = vcmp.lt.f32.partialorder %v880, 0.0004427343
    %v882 = vsel %vm881, %v879, %v876
    %v883 = vadd.f32 %v833, 1.0
    %v884 = vlog2.pop %v883
    %v885 = vmul.f32 %v884, 0.6931472
    %v886 = vmul.f32 -0.5, %v833
    %v887 = vadd.f32 %v886, 1.0
    %v888 = vmul.f32 %v887, %v833
    %v889 = vand.u32 2147483647, %v833
    %vm890 = vcmp.lt.f32.partialorder %v889, 0.0004427343
    %v891 = vsel %vm890, %v888, %v885
    %v892 = vadd.f32 %v835, 1.0
    %v893 = vlog2.pop %v892
    %v894 = vmul.f32 %v893, 0.6931472
    %v895 = vmul.f32 -0.5, %v835
    %v896 = vadd.f32 %v895, 1.0
    %v897 = vmul.f32 %v896, %v835
    %v898 = vand.u32 2147483647, %v835
    %vm899 = vcmp.lt.f32.partialorder %v898, 0.0004427343
    %v900 = vsel %vm899, %v897, %v894
    %v901 = vadd.f32 %v837, 1.0
    %v902 = vlog2.pop %v901
    %v903 = vmul.f32 %v902, 0.6931472
    %v904 = vmul.f32 -0.5, %v837
    %v905 = vadd.f32 %v904, 1.0
    %v906 = vmul.f32 %v905, %v837
    %v907 = vand.u32 2147483647, %v837
    %vm908 = vcmp.lt.f32.partialorder %v907, 0.0004427343
    %v909 = vsel %vm908, %v906, %v903
    %v910 = vadd.f32 %v798, %v846
    %v911 = vadd.f32 %v799, %v855
    %v912 = vadd.f32 %v800, %v864
    %v913 = vadd.f32 %v801, %v873
    %v914 = vadd.f32 %v802, %v882
    %v915 = vadd.f32 %v803, %v891
    %v916 = vadd.f32 %v804, %v900
    %v917 = vadd.f32 %v805, %v909
    %v918 = vrsqrt.pop %v910
    %v919 = vmul.f32 %v910, %v918
    %vm920 = vcmp.eq.f32.partialorder %v910, inf
    %v921 = vsel %vm920, %v910, %v919
    %vm922 = vcmp.eq.f32.partialorder %v910, 0.0
    %v923 = vand.u32 %v910, 2147483648
    %v924 = vsel %vm922, %v923, %v921
    %v925 = vrsqrt.pop %v911
    %v926 = vmul.f32 %v911, %v925
    %vm927 = vcmp.eq.f32.partialorder %v911, inf
    %v928 = vsel %vm927, %v911, %v926
    %vm929 = vcmp.eq.f32.partialorder %v911, 0.0
    %v930 = vand.u32 %v911, 2147483648
    %v931 = vsel %vm929, %v930, %v928
    %v932 = vrsqrt.pop %v912
    %v933 = vmul.f32 %v912, %v932
    %vm934 = vcmp.eq.f32.partialorder %v912, inf
    %v935 = vsel %vm934, %v912, %v933
    %vm936 = vcmp.eq.f32.partialorder %v912, 0.0
    %v937 = vand.u32 %v912, 2147483648
    %v938 = vsel %vm936, %v937, %v935
    %v939 = vrsqrt.pop %v913
    %v940 = vmul.f32 %v913, %v939
    %vm941 = vcmp.eq.f32.partialorder %v913, inf
    %v942 = vsel %vm941, %v913, %v940
    %vm943 = vcmp.eq.f32.partialorder %v913, 0.0
    %v944 = vand.u32 %v913, 2147483648
    %v945 = vsel %vm943, %v944, %v942
    %v946 = vrsqrt.pop %v914
    %v947 = vmul.f32 %v914, %v946
    %vm948 = vcmp.eq.f32.partialorder %v914, inf
    %v949 = vsel %vm948, %v914, %v947
    %vm950 = vcmp.eq.f32.partialorder %v914, 0.0
    %v951 = vand.u32 %v914, 2147483648
    %v952 = vsel %vm950, %v951, %v949
    %v953 = vrsqrt.pop %v915
    %v954 = vmul.f32 %v915, %v953
    %vm955 = vcmp.eq.f32.partialorder %v915, inf
    %v956 = vsel %vm955, %v915, %v954
    %vm957 = vcmp.eq.f32.partialorder %v915, 0.0
    %v958 = vand.u32 %v915, 2147483648
    %v959 = vsel %vm957, %v958, %v956
    %v960 = vrsqrt.pop %v916
    %v961 = vmul.f32 %v916, %v960
    %vm962 = vcmp.eq.f32.partialorder %v916, inf
    %v963 = vsel %vm962, %v916, %v961
    %vm964 = vcmp.eq.f32.partialorder %v916, 0.0
    %v965 = vand.u32 %v916, 2147483648
    %v966 = vsel %vm964, %v965, %v963
    %v967 = vrsqrt.pop %v917
    %v968 = vmul.f32 %v917, %v967
    %vm969 = vcmp.eq.f32.partialorder %v917, inf
    %v970 = vsel %vm969, %v917, %v968
    %vm971 = vcmp.eq.f32.partialorder %v917, 0.0
    %v972 = vand.u32 %v917, 2147483648
    %v973 = vsel %vm971, %v972, %v970
    %982 = vrot.lane.b32.xlu0 %v89, 32
    %v983 = vpop.permute.xlu0 %982
    %984 = vrot.lane.b32.xlu0 %v90, 32
    %v985 = vpop.permute.xlu0 %984
    %986 = vrot.lane.b32.xlu0 %v91, 32
    %v987 = vpop.permute.xlu0 %986
    %988 = vrot.lane.b32.xlu0 %v92, 32
    %v989 = vpop.permute.xlu0 %988
    %990 = vrot.lane.b32.xlu0 %v93, 32
    %v991 = vpop.permute.xlu0 %990
    %992 = vrot.lane.b32.xlu0 %v94, 32
    %v993 = vpop.permute.xlu0 %992
    %994 = vrot.lane.b32.xlu0 %v95, 32
    %v995 = vpop.permute.xlu0 %994
    %996 = vrot.lane.b32.xlu0 %v96, 32
    %v997 = vpop.permute.xlu0 %996
    %v1006 = vmul.f32 %v924, %v983
    %v1007 = vmul.f32 %v931, %v985
    %v1008 = vmul.f32 %v938, %v987
    %v1009 = vmul.f32 %v945, %v989
    %v1010 = vmul.f32 %v952, %v991
    %v1011 = vmul.f32 %v959, %v993
    %v1012 = vmul.f32 %v966, %v995
    %v1013 = vmul.f32 %v973, %v997
    %1022 = vrot.lane.b32.xlu0 %v1006, 96
    %v1023 = vpop.permute.xlu0 %1022
    %1024 = vrot.lane.b32.xlu0 %v1007, 96
    %v1025 = vpop.permute.xlu0 %1024
    %1026 = vrot.lane.b32.xlu0 %v1008, 96
    %v1027 = vpop.permute.xlu0 %1026
    %1028 = vrot.lane.b32.xlu0 %v1009, 96
    %v1029 = vpop.permute.xlu0 %1028
    %1030 = vrot.lane.b32.xlu0 %v1010, 96
    %v1031 = vpop.permute.xlu0 %1030
    %1032 = vrot.lane.b32.xlu0 %v1011, 96
    %v1033 = vpop.permute.xlu0 %1032
    %1034 = vrot.lane.b32.xlu0 %v1012, 96
    %v1035 = vpop.permute.xlu0 %1034
    %1036 = vrot.lane.b32.xlu0 %v1013, 96
    %v1037 = vpop.permute.xlu0 %1036
    %v1046 = vadd.f32 %v760, %v1023
    %v1047 = vadd.f32 %v765, %v1025
    %v1048 = vadd.f32 %v770, %v1027
    %v1049 = vadd.f32 %v775, %v1029
    %v1050 = vadd.f32 %v780, %v1031
    %v1051 = vadd.f32 %v785, %v1033
    %v1052 = vadd.f32 %v790, %v1035
    %v1053 = vadd.f32 %v795, %v1037
    %v1054 = vld [vmem:[%s12] sm:$0xff]
    %v1055 = vld [vmem:[%s12 + $0x8] sm:$0xff]
    %v1056 = vld [vmem:[%s12 + $0x10] sm:$0xff]
    %v1057 = vld [vmem:[%s12 + $0x18] sm:$0xff]
    %v1058 = vld [vmem:[%s13] sm:$0xff]
    %v1059 = vld [vmem:[%s13 + $0x8] sm:$0xff]
    %1060 = vmatprep.subr.mxu0 0.0
    %1061 = vmatpush1.msra.mxu0 %v1058
    %1062 = vmatprep.subr.mxu0 0.0
    %1063 = vmatpush1.msra.mxu0 %v1059
    %1064 = vmatprep.subr.mxu0 0.0
    %1065 = vmatpush1.msra.mxu0 0.0
    %1066 = vmatprep.subr.mxu0 0.0
    %1067 = vmatpush1.msra.mxu0 0.0
    %1068 = vmatprep.subr.mxu0 0.0
    %1069 = vmatpush1.msra.mxu0 0.0
    %1070 = vmatprep.subr.mxu0 0.0
    %1071 = vmatpush1.msra.mxu0 0.0
    %1072 = vmatprep.subr.mxu0 0.0
    %1073 = vmatpush1.msra.mxu0 0.0
    %1074 = vmatprep.subr.mxu0 0.0
    %1075 = vmatpush1.msra.mxu0 0.0
    %1076 = vmatprep.subr.mxu0 0.0
    %1077 = vmatpush1.msra.mxu0 0.0
    %1078 = vmatprep.subr.mxu0 0.0
    %1079 = vmatpush1.msra.mxu0 0.0
    %1080 = vmatprep.subr.mxu0 0.0
    %1081 = vmatpush1.msra.mxu0 0.0
    %1082 = vmatprep.subr.mxu0 0.0
    %1083 = vmatpush1.msra.mxu0 0.0
    %1084 = vmatprep.subr.mxu0 0.0
    %1085 = vmatpush1.msra.mxu0 0.0
    %1086 = vmatprep.subr.mxu0 0.0
    %1087 = vmatpush1.msra.mxu0 0.0
    %1088 = vmatprep.subr.mxu0 0.0
    %1089 = vmatpush1.msra.mxu0 0.0
    %1090 = vmatprep.subr.mxu0 0.0
    %1091 = vmatpush1.msra.mxu0 0.0
    %1092 = vmatprep.subr.mxu0 0.0
    %1093 = vmatpush1.msra.mxu0 0.0
    %1094 = vmatprep.subr.mxu0 0.0
    %1095 = vmatpush1.msra.mxu0 0.0
    %1096 = vmatprep.subr.mxu0 0.0
    %1097 = vmatpush1.msra.mxu0 0.0
    %1098 = vmatprep.subr.mxu0 0.0
    %1099 = vmatpush1.msra.mxu0 0.0
    %1100 = vmatprep.subr.mxu0 0.0
    %1101 = vmatpush1.msra.mxu0 0.0
    %1102 = vmatprep.subr.mxu0 0.0
    %1103 = vmatpush1.msra.mxu0 0.0
    %1104 = vmatprep.subr.mxu0 0.0
    %1105 = vmatpush1.msra.mxu0 0.0
    %1106 = vmatprep.subr.mxu0 0.0
    %1107 = vmatpush1.msra.mxu0 0.0
    %1108 = vmatprep.subr.mxu0 0.0
    %1109 = vmatpush1.msra.mxu0 0.0
    %1110 = vmatprep.subr.mxu0 0.0
    %1111 = vmatpush1.msra.mxu0 0.0
    %1112 = vmatprep.subr.mxu0 0.0
    %1113 = vmatpush1.msra.mxu0 0.0
    %1114 = vmatprep.subr.mxu0 0.0
    %1115 = vmatpush1.msra.mxu0 0.0
    %1116 = vmatprep.subr.mxu0 0.0
    %1117 = vmatpush1.msra.mxu0 0.0
    %1118 = vmatprep.subr.mxu0 0.0
    %1119 = vmatpush1.msra.mxu0 0.0
    %1120 = vmatprep.subr.mxu0 0.0
    %1121 = vmatpush1.msra.mxu0 0.0
    %1122 = vmatprep.subr.mxu0 0.0
    %1123 = vmatpush1.msra.mxu0 0.0
    %1124 = vmatprep.mubr.f32.mxu0 0.0
    %1125 = vmatmul.mubr.f32.gmra.mrb[0].mxu0 %v117
    %v1126 = vpop.f32.mrb[0].mxu0
    %v1127 = vadd.f32 0.0, %v1126
    %v1128 = vpop.f32.mrb[0].mxu0
    %1129 = vmatprep.mubr.f32.mxu0 0.0
    %1130 = vmatmul.mubr.f32.gmra.mrb[0].mxu0 %v120
    %v1131 = vpop.f32.mrb[0].mxu0
    %v1132 = vadd.f32 0.0, %v1131
    %v1133 = vpop.f32.mrb[0].mxu0
    %1134 = vmatprep.mubr.f32.mxu0 0.0
    %1135 = vmatmul.mubr.f32.gmra.mrb[0].mxu0 %v123
    %v1136 = vpop.f32.mrb[0].mxu0
    %v1137 = vadd.f32 0.0, %v1136
    %v1138 = vpop.f32.mrb[0].mxu0
    %1139 = vmatprep.mubr.f32.mxu0 0.0
    %1140 = vmatmul.mubr.f32.gmra.mrb[0].mxu0 %v126
    %v1141 = vpop.f32.mrb[0].mxu0
    %v1142 = vadd.f32 0.0, %v1141
    %v1143 = vpop.f32.mrb[0].mxu0
    %1144 = vmatprep.mubr.f32.mxu0 0.0
    %1145 = vmatmul.mubr.f32.gmra.mrb[0].mxu0 %v129
    %v1146 = vpop.f32.mrb[0].mxu0
    %v1147 = vadd.f32 0.0, %v1146
    %v1148 = vpop.f32.mrb[0].mxu0
    %1149 = vmatprep.mubr.f32.mxu0 0.0
    %1150 = vmatmul.mubr.f32.gmra.mrb[0].mxu0 %v132
    %v1151 = vpop.f32.mrb[0].mxu0
    %v1152 = vadd.f32 0.0, %v1151
    %v1153 = vpop.f32.mrb[0].mxu0
    %1154 = vmatprep.mubr.f32.mxu0 0.0
    %1155 = vmatmul.mubr.f32.gmra.mrb[0].mxu0 %v135
    %v1156 = vpop.f32.mrb[0].mxu0
    %v1157 = vadd.f32 0.0, %v1156
    %v1158 = vpop.f32.mrb[0].mxu0
    %1159 = vmatprep.mubr.f32.mxu0 0.0
    %1160 = vmatmul.mubr.f32.gmra.mrb[0].mxu0 %v138
    %v1161 = vpop.f32.mrb[0].mxu0
    %v1162 = vadd.f32 0.0, %v1161
    %v1163 = vpop.f32.mrb[0].mxu0
    %1164 = vdwg.mxu0
    %vm1165 = vcmask 261120
    %v1167 = vsel %vm1165, %v1046, 0
    %v1170 = vsel %vm1165, %v1047, 0
    %v1173 = vsel %vm1165, %v1048, 0
    %v1176 = vsel %vm1165, %v1049, 0
    %v1179 = vsel %vm1165, %v1050, 0
    %v1182 = vsel %vm1165, %v1051, 0
    %v1185 = vsel %vm1165, %v1052, 0
    %v1188 = vsel %vm1165, %v1053, 0
    %1190 = vmatprep.subr.mxu0 0.0
    %1191 = vmatpush1.msra.mxu0 %v1054
    %1192 = vmatprep.subr.mxu0 0.0
    %1193 = vmatpush1.msra.mxu0 %v1055
    %1194 = vmatprep.subr.mxu0 0.0
    %1195 = vmatpush1.msra.mxu0 %v1056
    %1196 = vmatprep.subr.mxu0 0.0
    %1197 = vmatpush1.msra.mxu0 %v1057
    %1198 = vmatprep.subr.mxu0 0.0
    %1199 = vmatpush1.msra.mxu0 0.0
    %1200 = vmatprep.subr.mxu0 0.0
    %1201 = vmatpush1.msra.mxu0 0.0
    %1202 = vmatprep.subr.mxu0 0.0
    %1203 = vmatpush1.msra.mxu0 0.0
    %1204 = vmatprep.subr.mxu0 0.0
    %1205 = vmatpush1.msra.mxu0 0.0
    %1206 = vmatprep.subr.mxu0 0.0
    %1207 = vmatpush1.msra.mxu0 0.0
    %1208 = vmatprep.subr.mxu0 0.0
    %1209 = vmatpush1.msra.mxu0 0.0
    %1210 = vmatprep.subr.mxu0 0.0
    %1211 = vmatpush1.msra.mxu0 0.0
    %1212 = vmatprep.subr.mxu0 0.0
    %1213 = vmatpush1.msra.mxu0 0.0
    %1214 = vmatprep.subr.mxu0 0.0
    %1215 = vmatpush1.msra.mxu0 0.0
    %1216 = vmatprep.subr.mxu0 0.0
    %1217 = vmatpush1.msra.mxu0 0.0
    %1218 = vmatprep.subr.mxu0 0.0
    %1219 = vmatpush1.msra.mxu0 0.0
    %1220 = vmatprep.subr.mxu0 0.0
    %1221 = vmatpush1.msra.mxu0 0.0
    %1222 = vmatprep.subr.mxu0 0.0
    %1223 = vmatpush1.msra.mxu0 0.0
    %1224 = vmatprep.subr.mxu0 0.0
    %1225 = vmatpush1.msra.mxu0 0.0
    %1226 = vmatprep.subr.mxu0 0.0
    %1227 = vmatpush1.msra.mxu0 0.0
    %1228 = vmatprep.subr.mxu0 0.0
    %1229 = vmatpush1.msra.mxu0 0.0
    %1230 = vmatprep.subr.mxu0 0.0
    %1231 = vmatpush1.msra.mxu0 0.0
    %1232 = vmatprep.subr.mxu0 0.0
    %1233 = vmatpush1.msra.mxu0 0.0
    %1234 = vmatprep.subr.mxu0 0.0
    %1235 = vmatpush1.msra.mxu0 0.0
    %1236 = vmatprep.subr.mxu0 0.0
    %1237 = vmatpush1.msra.mxu0 0.0
    %1238 = vmatprep.subr.mxu0 0.0
    %1239 = vmatpush1.msra.mxu0 0.0
    %1240 = vmatprep.subr.mxu0 0.0
    %1241 = vmatpush1.msra.mxu0 0.0
    %1242 = vmatprep.subr.mxu0 0.0
    %1243 = vmatpush1.msra.mxu0 0.0
    %1244 = vmatprep.subr.mxu0 0.0
    %1245 = vmatpush1.msra.mxu0 0.0
    %1246 = vmatprep.subr.mxu0 0.0
    %1247 = vmatpush1.msra.mxu0 0.0
    %1248 = vmatprep.subr.mxu0 0.0
    %1249 = vmatpush1.msra.mxu0 0.0
    %1250 = vmatprep.subr.mxu0 0.0
    %1251 = vmatpush1.msra.mxu0 0.0
    %1252 = vmatprep.subr.mxu0 0.0
    %1253 = vmatpush1.msra.mxu0 0.0
    %1254 = vmatprep.mubr.f32.mxu0 0.0
    %1255 = vmatmul.mubr.f32.gmra.mrb[0].mxu0 %v1167
    %v1256 = vpop.f32.mrb[0].mxu0
    %v1257 = vadd.f32 %v1127, %v1256
    %v1258 = vpop.f32.mrb[0].mxu0
    %1259 = vmatprep.mubr.f32.mxu0 0.0
    %1260 = vmatmul.mubr.f32.gmra.mrb[0].mxu0 %v1170
    %v1261 = vpop.f32.mrb[0].mxu0
    %v1262 = vadd.f32 %v1132, %v1261
    %v1263 = vpop.f32.mrb[0].mxu0
    %1264 = vmatprep.mubr.f32.mxu0 0.0
    %1265 = vmatmul.mubr.f32.gmra.mrb[0].mxu0 %v1173
    %v1266 = vpop.f32.mrb[0].mxu0
    %v1267 = vadd.f32 %v1137, %v1266
    %v1268 = vpop.f32.mrb[0].mxu0
    %1269 = vmatprep.mubr.f32.mxu0 0.0
    %1270 = vmatmul.mubr.f32.gmra.mrb[0].mxu0 %v1176
    %v1271 = vpop.f32.mrb[0].mxu0
    %v1272 = vadd.f32 %v1142, %v1271
    %v1273 = vpop.f32.mrb[0].mxu0
    %1274 = vmatprep.mubr.f32.mxu0 0.0
    %1275 = vmatmul.mubr.f32.gmra.mrb[0].mxu0 %v1179
    %v1276 = vpop.f32.mrb[0].mxu0
    %v1277 = vadd.f32 %v1147, %v1276
    %v1278 = vpop.f32.mrb[0].mxu0
    %1279 = vmatprep.mubr.f32.mxu0 0.0
    %1280 = vmatmul.mubr.f32.gmra.mrb[0].mxu0 %v1182
    %v1281 = vpop.f32.mrb[0].mxu0
    %v1282 = vadd.f32 %v1152, %v1281
    %v1283 = vpop.f32.mrb[0].mxu0
    %1284 = vmatprep.mubr.f32.mxu0 0.0
    %1285 = vmatmul.mubr.f32.gmra.mrb[0].mxu0 %v1185
    %v1286 = vpop.f32.mrb[0].mxu0
    %v1287 = vadd.f32 %v1157, %v1286
    %v1288 = vpop.f32.mrb[0].mxu0
    %1289 = vmatprep.mubr.f32.mxu0 0.0
    %1290 = vmatmul.mubr.f32.gmra.mrb[0].mxu0 %v1188
    %v1291 = vpop.f32.mrb[0].mxu0
    %v1292 = vadd.f32 %v1162, %v1291
    %v1293 = vpop.f32.mrb[0].mxu0
    %1294 = vdwg.mxu0
    %v1295 = vld [vmem:[%s14] sm:$0x1]
    %v1297 = vlaneseq
    %v1298 = vshrl.u32 %v1297, 7
    %v1299 = vsub.s32 0, %v1298
    %v1300 = vrot.slane %v1295, %v1299
    %v1302 = vadd.f32 %v1257, %v1300
    %v1303 = vadd.f32 %v1262, %v1300
    %v1304 = vadd.f32 %v1267, %v1300
    %v1305 = vadd.f32 %v1272, %v1300
    %v1306 = vadd.f32 %v1277, %v1300
    %v1307 = vadd.f32 %v1282, %v1300
    %v1308 = vadd.f32 %v1287, %v1300
    %v1309 = vadd.f32 %v1292, %v1300
    %v1310 = vmul.f32 %v1302, 0.7
    %v1311 = vmul.f32 %v1303, 0.7
    %v1312 = vmul.f32 %v1304, 0.7
    %v1313 = vmul.f32 %v1305, 0.7
    %v1314 = vmul.f32 %v1306, 0.7
    %v1315 = vmul.f32 %v1307, 0.7
    %v1316 = vmul.f32 %v1308, 0.7
    %v1317 = vmul.f32 %v1309, 0.7
    %v1318 = vmax.f32 %v1302, %v1310
    %v1319 = vmax.f32 %v1303, %v1311
    %v1320 = vmax.f32 %v1304, %v1312
    %v1321 = vmax.f32 %v1305, %v1313
    %v1322 = vmax.f32 %v1306, %v1314
    %v1323 = vmax.f32 %v1307, %v1315
    %v1324 = vmax.f32 %v1308, %v1316
    %v1325 = vmax.f32 %v1309, %v1317
    %v1326 = vld [vmem:[%s15] sm:$0xff]
    %v1327 = vld [vmem:[%s15 + $0x8] sm:$0xff]
    %v1328 = vld [vmem:[%s15 + $0x10] sm:$0xff]
    %v1329 = vld [vmem:[%s15 + $0x18] sm:$0xff]
    %v1330 = vld [vmem:[%s15 + $0x20] sm:$0xff]
    %v1331 = vld [vmem:[%s15 + $0x28] sm:$0xff]
    %v1332 = vld [vmem:[%s15 + $0x30] sm:$0xff]
    %v1333 = vld [vmem:[%s15 + $0x38] sm:$0xff]
    %v1334 = vld [vmem:[%s15 + $0x40] sm:$0xff]
    %v1335 = vld [vmem:[%s15 + $0x48] sm:$0xff]
    %v1336 = vld [vmem:[%s15 + $0x50] sm:$0xff]
    %v1337 = vld [vmem:[%s15 + $0x58] sm:$0xff]
    %v1338 = vld [vmem:[%s15 + $0x60] sm:$0xff]
    %v1339 = vld [vmem:[%s15 + $0x68] sm:$0xff]
    %v1340 = vld [vmem:[%s15 + $0x70] sm:$0xff]
    %v1341 = vld [vmem:[%s15 + $0x78] sm:$0xff]
    %v1342 = vld [vmem:[%s16] sm:$0x1]
    %v1344 = vlaneseq
    %v1345 = vshrl.u32 %v1344, 7
    %v1346 = vsub.s32 0, %v1345
    %v1347 = vrot.slane %v1342, %v1346
    %1349 = vmatprep.subr.mxu0 0.0
    %1350 = vmatpush1.msra.mxu0 %v1326
    %1351 = vmatprep.subr.mxu0 0.0
    %1352 = vmatpush1.msra.mxu0 %v1327
    %1353 = vmatprep.subr.mxu0 0.0
    %1354 = vmatpush1.msra.mxu0 %v1328
    %1355 = vmatprep.subr.mxu0 0.0
    %1356 = vmatpush1.msra.mxu0 %v1329
    %1357 = vmatprep.subr.mxu0 0.0
    %1358 = vmatpush1.msra.mxu0 %v1330
    %1359 = vmatprep.subr.mxu0 0.0
    %1360 = vmatpush1.msra.mxu0 %v1331
    %1361 = vmatprep.subr.mxu0 0.0
    %1362 = vmatpush1.msra.mxu0 %v1332
    %1363 = vmatprep.subr.mxu0 0.0
    %1364 = vmatpush1.msra.mxu0 %v1333
    %1365 = vmatprep.subr.mxu0 0.0
    %1366 = vmatpush1.msra.mxu0 %v1334
    %1367 = vmatprep.subr.mxu0 0.0
    %1368 = vmatpush1.msra.mxu0 %v1335
    %1369 = vmatprep.subr.mxu0 0.0
    %1370 = vmatpush1.msra.mxu0 %v1336
    %1371 = vmatprep.subr.mxu0 0.0
    %1372 = vmatpush1.msra.mxu0 %v1337
    %1373 = vmatprep.subr.mxu0 0.0
    %1374 = vmatpush1.msra.mxu0 %v1338
    %1375 = vmatprep.subr.mxu0 0.0
    %1376 = vmatpush1.msra.mxu0 %v1339
    %1377 = vmatprep.subr.mxu0 0.0
    %1378 = vmatpush1.msra.mxu0 %v1340
    %1379 = vmatprep.subr.mxu0 0.0
    %1380 = vmatpush1.msra.mxu0 %v1341
    %1381 = vmatprep.subr.mxu0 0.0
    %1382 = vmatpush1.msra.mxu0 0.0
    %1383 = vmatprep.subr.mxu0 0.0
    %1384 = vmatpush1.msra.mxu0 0.0
    %1385 = vmatprep.subr.mxu0 0.0
    %1386 = vmatpush1.msra.mxu0 0.0
    %1387 = vmatprep.subr.mxu0 0.0
    %1388 = vmatpush1.msra.mxu0 0.0
    %1389 = vmatprep.subr.mxu0 0.0
    %1390 = vmatpush1.msra.mxu0 0.0
    %1391 = vmatprep.subr.mxu0 0.0
    %1392 = vmatpush1.msra.mxu0 0.0
    %1393 = vmatprep.subr.mxu0 0.0
    %1394 = vmatpush1.msra.mxu0 0.0
    %1395 = vmatprep.subr.mxu0 0.0
    %1396 = vmatpush1.msra.mxu0 0.0
    %1397 = vmatprep.subr.mxu0 0.0
    %1398 = vmatpush1.msra.mxu0 0.0
    %1399 = vmatprep.subr.mxu0 0.0
    %1400 = vmatpush1.msra.mxu0 0.0
    %1401 = vmatprep.subr.mxu0 0.0
    %1402 = vmatpush1.msra.mxu0 0.0
    %1403 = vmatprep.subr.mxu0 0.0
    %1404 = vmatpush1.msra.mxu0 0.0
    %1405 = vmatprep.subr.mxu0 0.0
    %1406 = vmatpush1.msra.mxu0 0.0
    %1407 = vmatprep.subr.mxu0 0.0
    %1408 = vmatpush1.msra.mxu0 0.0
    %1409 = vmatprep.subr.mxu0 0.0
    %1410 = vmatpush1.msra.mxu0 0.0
    %1411 = vmatprep.subr.mxu0 0.0
    %1412 = vmatpush1.msra.mxu0 0.0
    %1413 = vmatprep.mubr.f32.mxu0 0.0
    %1414 = vmatmul.mubr.f32.gmra.mrb[0].mxu0 %v1318
    %v1415 = vpop.f32.mrb[0].mxu0
    %v1416 = vadd.f32 %v1347, %v1415
    %v1417 = vpop.f32.mrb[0].mxu0
    %1418 = vmatprep.mubr.f32.mxu0 0.0
    %1419 = vmatmul.mubr.f32.gmra.mrb[0].mxu0 %v1319
    %v1420 = vpop.f32.mrb[0].mxu0
    %v1421 = vadd.f32 %v1347, %v1420
    %v1422 = vpop.f32.mrb[0].mxu0
    %1423 = vmatprep.mubr.f32.mxu0 0.0
    %1424 = vmatmul.mubr.f32.gmra.mrb[0].mxu0 %v1320
    %v1425 = vpop.f32.mrb[0].mxu0
    %v1426 = vadd.f32 %v1347, %v1425
    %v1427 = vpop.f32.mrb[0].mxu0
    %1428 = vmatprep.mubr.f32.mxu0 0.0
    %1429 = vmatmul.mubr.f32.gmra.mrb[0].mxu0 %v1321
    %v1430 = vpop.f32.mrb[0].mxu0
    %v1431 = vadd.f32 %v1347, %v1430
    %v1432 = vpop.f32.mrb[0].mxu0
    %1433 = vmatprep.mubr.f32.mxu0 0.0
    %1434 = vmatmul.mubr.f32.gmra.mrb[0].mxu0 %v1322
    %v1435 = vpop.f32.mrb[0].mxu0
    %v1436 = vadd.f32 %v1347, %v1435
    %v1437 = vpop.f32.mrb[0].mxu0
    %1438 = vmatprep.mubr.f32.mxu0 0.0
    %1439 = vmatmul.mubr.f32.gmra.mrb[0].mxu0 %v1323
    %v1440 = vpop.f32.mrb[0].mxu0
    %v1441 = vadd.f32 %v1347, %v1440
    %v1442 = vpop.f32.mrb[0].mxu0
    %1443 = vmatprep.mubr.f32.mxu0 0.0
    %1444 = vmatmul.mubr.f32.gmra.mrb[0].mxu0 %v1324
    %v1445 = vpop.f32.mrb[0].mxu0
    %v1446 = vadd.f32 %v1347, %v1445
    %v1447 = vpop.f32.mrb[0].mxu0
    %1448 = vmatprep.mubr.f32.mxu0 0.0
    %1449 = vmatmul.mubr.f32.gmra.mrb[0].mxu0 %v1325
    %v1450 = vpop.f32.mrb[0].mxu0
    %v1451 = vadd.f32 %v1347, %v1450
    %v1452 = vpop.f32.mrb[0].mxu0
    %1453 = vdwg.mxu0
    %v1454 = vld [vmem:[%s17] sm:$0xff]
    %v1455 = vld [vmem:[%s17 + $0x8] sm:$0xff]
    %v1456 = vld [vmem:[%s17 + $0x10] sm:$0xff]
    %v1457 = vld [vmem:[%s17 + $0x18] sm:$0xff]
    %v1458 = vld [vmem:[%s17 + $0x20] sm:$0xff]
    %v1459 = vld [vmem:[%s17 + $0x28] sm:$0xff]
    %v1460 = vld [vmem:[%s17 + $0x30] sm:$0xff]
    %v1461 = vld [vmem:[%s17 + $0x38] sm:$0xff]
    %v1462 = vld [vmem:[%s17 + $0x40] sm:$0xff]
    %v1463 = vld [vmem:[%s17 + $0x48] sm:$0xff]
    %v1464 = vld [vmem:[%s17 + $0x50] sm:$0xff]
    %v1465 = vld [vmem:[%s17 + $0x58] sm:$0xff]
    %v1466 = vld [vmem:[%s17 + $0x60] sm:$0xff]
    %v1467 = vld [vmem:[%s17 + $0x68] sm:$0xff]
    %v1468 = vld [vmem:[%s17 + $0x70] sm:$0xff]
    %v1469 = vld [vmem:[%s17 + $0x78] sm:$0xff]
    %v1470 = vld [vmem:[%s18] sm:$0x1]
    %v1472 = vlaneseq
    %v1473 = vshrl.u32 %v1472, 7
    %v1474 = vsub.s32 0, %v1473
    %v1475 = vrot.slane %v1470, %v1474
    %1477 = vmatprep.subr.mxu0 0.0
    %1478 = vmatpush1.msra.mxu0 %v1454
    %1479 = vmatprep.subr.mxu0 0.0
    %1480 = vmatpush1.msra.mxu0 %v1455
    %1481 = vmatprep.subr.mxu0 0.0
    %1482 = vmatpush1.msra.mxu0 %v1456
    %1483 = vmatprep.subr.mxu0 0.0
    %1484 = vmatpush1.msra.mxu0 %v1457
    %1485 = vmatprep.subr.mxu0 0.0
    %1486 = vmatpush1.msra.mxu0 %v1458
    %1487 = vmatprep.subr.mxu0 0.0
    %1488 = vmatpush1.msra.mxu0 %v1459
    %1489 = vmatprep.subr.mxu0 0.0
    %1490 = vmatpush1.msra.mxu0 %v1460
    %1491 = vmatprep.subr.mxu0 0.0
    %1492 = vmatpush1.msra.mxu0 %v1461
    %1493 = vmatprep.subr.mxu0 0.0
    %1494 = vmatpush1.msra.mxu0 %v1462
    %1495 = vmatprep.subr.mxu0 0.0
    %1496 = vmatpush1.msra.mxu0 %v1463
    %1497 = vmatprep.subr.mxu0 0.0
    %1498 = vmatpush1.msra.mxu0 %v1464
    %1499 = vmatprep.subr.mxu0 0.0
    %1500 = vmatpush1.msra.mxu0 %v1465
    %1501 = vmatprep.subr.mxu0 0.0
    %1502 = vmatpush1.msra.mxu0 %v1466
    %1503 = vmatprep.subr.mxu0 0.0
    %1504 = vmatpush1.msra.mxu0 %v1467
    %1505 = vmatprep.subr.mxu0 0.0
    %1506 = vmatpush1.msra.mxu0 %v1468
    %1507 = vmatprep.subr.mxu0 0.0
    %1508 = vmatpush1.msra.mxu0 %v1469
    %1509 = vmatprep.subr.mxu0 0.0
    %1510 = vmatpush1.msra.mxu0 0.0
    %1511 = vmatprep.subr.mxu0 0.0
    %1512 = vmatpush1.msra.mxu0 0.0
    %1513 = vmatprep.subr.mxu0 0.0
    %1514 = vmatpush1.msra.mxu0 0.0
    %1515 = vmatprep.subr.mxu0 0.0
    %1516 = vmatpush1.msra.mxu0 0.0
    %1517 = vmatprep.subr.mxu0 0.0
    %1518 = vmatpush1.msra.mxu0 0.0
    %1519 = vmatprep.subr.mxu0 0.0
    %1520 = vmatpush1.msra.mxu0 0.0
    %1521 = vmatprep.subr.mxu0 0.0
    %1522 = vmatpush1.msra.mxu0 0.0
    %1523 = vmatprep.subr.mxu0 0.0
    %1524 = vmatpush1.msra.mxu0 0.0
    %1525 = vmatprep.subr.mxu0 0.0
    %1526 = vmatpush1.msra.mxu0 0.0
    %1527 = vmatprep.subr.mxu0 0.0
    %1528 = vmatpush1.msra.mxu0 0.0
    %1529 = vmatprep.subr.mxu0 0.0
    %1530 = vmatpush1.msra.mxu0 0.0
    %1531 = vmatprep.subr.mxu0 0.0
    %1532 = vmatpush1.msra.mxu0 0.0
    %1533 = vmatprep.subr.mxu0 0.0
    %1534 = vmatpush1.msra.mxu0 0.0
    %1535 = vmatprep.subr.mxu0 0.0
    %1536 = vmatpush1.msra.mxu0 0.0
    %1537 = vmatprep.subr.mxu0 0.0
    %1538 = vmatpush1.msra.mxu0 0.0
    %1539 = vmatprep.subr.mxu0 0.0
    %1540 = vmatpush1.msra.mxu0 0.0
    %1541 = vmatprep.mubr.f32.mxu0 0.0
    %1542 = vmatmul.mubr.f32.gmra.mrb[0].mxu0 %v1416
    %v1543 = vpop.f32.mrb[0].mxu0
    %v1544 = vadd.f32 %v1475, %v1543
    %v1545 = vpop.f32.mrb[0].mxu0
    %1546 = vmatprep.mubr.f32.mxu0 0.0
    %1547 = vmatmul.mubr.f32.gmra.mrb[0].mxu0 %v1421
    %v1548 = vpop.f32.mrb[0].mxu0
    %v1549 = vadd.f32 %v1475, %v1548
    %v1550 = vpop.f32.mrb[0].mxu0
    %1551 = vmatprep.mubr.f32.mxu0 0.0
    %1552 = vmatmul.mubr.f32.gmra.mrb[0].mxu0 %v1426
    %v1553 = vpop.f32.mrb[0].mxu0
    %v1554 = vadd.f32 %v1475, %v1553
    %v1555 = vpop.f32.mrb[0].mxu0
    %1556 = vmatprep.mubr.f32.mxu0 0.0
    %1557 = vmatmul.mubr.f32.gmra.mrb[0].mxu0 %v1431
    %v1558 = vpop.f32.mrb[0].mxu0
    %v1559 = vadd.f32 %v1475, %v1558
    %v1560 = vpop.f32.mrb[0].mxu0
    %1561 = vmatprep.mubr.f32.mxu0 0.0
    %1562 = vmatmul.mubr.f32.gmra.mrb[0].mxu0 %v1436
    %v1563 = vpop.f32.mrb[0].mxu0
    %v1564 = vadd.f32 %v1475, %v1563
    %v1565 = vpop.f32.mrb[0].mxu0
    %1566 = vmatprep.mubr.f32.mxu0 0.0
    %1567 = vmatmul.mubr.f32.gmra.mrb[0].mxu0 %v1441
    %v1568 = vpop.f32.mrb[0].mxu0
    %v1569 = vadd.f32 %v1475, %v1568
    %v1570 = vpop.f32.mrb[0].mxu0
    %1571 = vmatprep.mubr.f32.mxu0 0.0
    %1572 = vmatmul.mubr.f32.gmra.mrb[0].mxu0 %v1446
    %v1573 = vpop.f32.mrb[0].mxu0
    %v1574 = vadd.f32 %v1475, %v1573
    %v1575 = vpop.f32.mrb[0].mxu0
    %1576 = vmatprep.mubr.f32.mxu0 0.0
    %1577 = vmatmul.mubr.f32.gmra.mrb[0].mxu0 %v1451
    %v1578 = vpop.f32.mrb[0].mxu0
    %v1579 = vadd.f32 %v1475, %v1578
    %v1580 = vpop.f32.mrb[0].mxu0
    %1581 = vdwg.mxu0
    %v1582 = vmul.f32 %v1544, 0.7
    %v1583 = vmul.f32 %v1549, 0.7
    %v1584 = vmul.f32 %v1554, 0.7
    %v1585 = vmul.f32 %v1559, 0.7
    %v1586 = vmul.f32 %v1564, 0.7
    %v1587 = vmul.f32 %v1569, 0.7
    %v1588 = vmul.f32 %v1574, 0.7
    %v1589 = vmul.f32 %v1579, 0.7
    %v1590 = vmax.f32 %v1544, %v1582
    %v1591 = vmax.f32 %v1549, %v1583
    %v1592 = vmax.f32 %v1554, %v1584
    %v1593 = vmax.f32 %v1559, %v1585
    %v1594 = vmax.f32 %v1564, %v1586
    %v1595 = vmax.f32 %v1569, %v1587
    %v1596 = vmax.f32 %v1574, %v1588
    %v1597 = vmax.f32 %v1579, %v1589
    %v1598 = vld [vmem:[%s19] sm:$0xff]
    %v1599 = vld [vmem:[%s19 + $0x8] sm:$0xff]
    %v1600 = vld [vmem:[%s19 + $0x10] sm:$0xff]
    %v1601 = vld [vmem:[%s19 + $0x18] sm:$0xff]
    %v1602 = vld [vmem:[%s19 + $0x20] sm:$0xff]
    %v1603 = vld [vmem:[%s19 + $0x28] sm:$0xff]
    %v1604 = vld [vmem:[%s19 + $0x30] sm:$0xff]
    %v1605 = vld [vmem:[%s19 + $0x38] sm:$0xff]
    %v1606 = vld [vmem:[%s19 + $0x40] sm:$0xff]
    %v1607 = vld [vmem:[%s19 + $0x48] sm:$0xff]
    %v1608 = vld [vmem:[%s19 + $0x50] sm:$0xff]
    %v1609 = vld [vmem:[%s19 + $0x58] sm:$0xff]
    %v1610 = vld [vmem:[%s19 + $0x60] sm:$0xff]
    %v1611 = vld [vmem:[%s19 + $0x68] sm:$0xff]
    %v1612 = vld [vmem:[%s19 + $0x70] sm:$0xff]
    %v1613 = vld [vmem:[%s19 + $0x78] sm:$0xff]
    %v1614 = vld [vmem:[%s20] sm:$0x1]
    %v1616 = vlaneseq
    %v1617 = vshrl.u32 %v1616, 7
    %v1618 = vsub.s32 0, %v1617
    %v1619 = vrot.slane %v1614, %v1618
    %1621 = vmatprep.subr.mxu0 0.0
    %1622 = vmatpush1.msra.mxu0 %v1598
    %1623 = vmatprep.subr.mxu0 0.0
    %1624 = vmatpush1.msra.mxu0 %v1599
    %1625 = vmatprep.subr.mxu0 0.0
    %1626 = vmatpush1.msra.mxu0 %v1600
    %1627 = vmatprep.subr.mxu0 0.0
    %1628 = vmatpush1.msra.mxu0 %v1601
    %1629 = vmatprep.subr.mxu0 0.0
    %1630 = vmatpush1.msra.mxu0 %v1602
    %1631 = vmatprep.subr.mxu0 0.0
    %1632 = vmatpush1.msra.mxu0 %v1603
    %1633 = vmatprep.subr.mxu0 0.0
    %1634 = vmatpush1.msra.mxu0 %v1604
    %1635 = vmatprep.subr.mxu0 0.0
    %1636 = vmatpush1.msra.mxu0 %v1605
    %1637 = vmatprep.subr.mxu0 0.0
    %1638 = vmatpush1.msra.mxu0 %v1606
    %1639 = vmatprep.subr.mxu0 0.0
    %1640 = vmatpush1.msra.mxu0 %v1607
    %1641 = vmatprep.subr.mxu0 0.0
    %1642 = vmatpush1.msra.mxu0 %v1608
    %1643 = vmatprep.subr.mxu0 0.0
    %1644 = vmatpush1.msra.mxu0 %v1609
    %1645 = vmatprep.subr.mxu0 0.0
    %1646 = vmatpush1.msra.mxu0 %v1610
    %1647 = vmatprep.subr.mxu0 0.0
    %1648 = vmatpush1.msra.mxu0 %v1611
    %1649 = vmatprep.subr.mxu0 0.0
    %1650 = vmatpush1.msra.mxu0 %v1612
    %1651 = vmatprep.subr.mxu0 0.0
    %1652 = vmatpush1.msra.mxu0 %v1613
    %1653 = vmatprep.subr.mxu0 0.0
    %1654 = vmatpush1.msra.mxu0 0.0
    %1655 = vmatprep.subr.mxu0 0.0
    %1656 = vmatpush1.msra.mxu0 0.0
    %1657 = vmatprep.subr.mxu0 0.0
    %1658 = vmatpush1.msra.mxu0 0.0
    %1659 = vmatprep.subr.mxu0 0.0
    %1660 = vmatpush1.msra.mxu0 0.0
    %1661 = vmatprep.subr.mxu0 0.0
    %1662 = vmatpush1.msra.mxu0 0.0
    %1663 = vmatprep.subr.mxu0 0.0
    %1664 = vmatpush1.msra.mxu0 0.0
    %1665 = vmatprep.subr.mxu0 0.0
    %1666 = vmatpush1.msra.mxu0 0.0
    %1667 = vmatprep.subr.mxu0 0.0
    %1668 = vmatpush1.msra.mxu0 0.0
    %1669 = vmatprep.subr.mxu0 0.0
    %1670 = vmatpush1.msra.mxu0 0.0
    %1671 = vmatprep.subr.mxu0 0.0
    %1672 = vmatpush1.msra.mxu0 0.0
    %1673 = vmatprep.subr.mxu0 0.0
    %1674 = vmatpush1.msra.mxu0 0.0
    %1675 = vmatprep.subr.mxu0 0.0
    %1676 = vmatpush1.msra.mxu0 0.0
    %1677 = vmatprep.subr.mxu0 0.0
    %1678 = vmatpush1.msra.mxu0 0.0
    %1679 = vmatprep.subr.mxu0 0.0
    %1680 = vmatpush1.msra.mxu0 0.0
    %1681 = vmatprep.subr.mxu0 0.0
    %1682 = vmatpush1.msra.mxu0 0.0
    %1683 = vmatprep.subr.mxu0 0.0
    %1684 = vmatpush1.msra.mxu0 0.0
    %1685 = vmatprep.mubr.f32.mxu0 0.0
    %1686 = vmatmul.mubr.f32.gmra.mrb[0].mxu0 %v1590
    %v1687 = vpop.f32.mrb[0].mxu0
    %v1688 = vadd.f32 %v1619, %v1687
    %v1689 = vpop.f32.mrb[0].mxu0
    %1690 = vmatprep.mubr.f32.mxu0 0.0
    %1691 = vmatmul.mubr.f32.gmra.mrb[0].mxu0 %v1591
    %v1692 = vpop.f32.mrb[0].mxu0
    %v1693 = vadd.f32 %v1619, %v1692
    %v1694 = vpop.f32.mrb[0].mxu0
    %1695 = vmatprep.mubr.f32.mxu0 0.0
    %1696 = vmatmul.mubr.f32.gmra.mrb[0].mxu0 %v1592
    %v1697 = vpop.f32.mrb[0].mxu0
    %v1698 = vadd.f32 %v1619, %v1697
    %v1699 = vpop.f32.mrb[0].mxu0
    %1700 = vmatprep.mubr.f32.mxu0 0.0
    %1701 = vmatmul.mubr.f32.gmra.mrb[0].mxu0 %v1593
    %v1702 = vpop.f32.mrb[0].mxu0
    %v1703 = vadd.f32 %v1619, %v1702
    %v1704 = vpop.f32.mrb[0].mxu0
    %1705 = vmatprep.mubr.f32.mxu0 0.0
    %1706 = vmatmul.mubr.f32.gmra.mrb[0].mxu0 %v1594
    %v1707 = vpop.f32.mrb[0].mxu0
    %v1708 = vadd.f32 %v1619, %v1707
    %v1709 = vpop.f32.mrb[0].mxu0
    %1710 = vmatprep.mubr.f32.mxu0 0.0
    %1711 = vmatmul.mubr.f32.gmra.mrb[0].mxu0 %v1595
    %v1712 = vpop.f32.mrb[0].mxu0
    %v1713 = vadd.f32 %v1619, %v1712
    %v1714 = vpop.f32.mrb[0].mxu0
    %1715 = vmatprep.mubr.f32.mxu0 0.0
    %1716 = vmatmul.mubr.f32.gmra.mrb[0].mxu0 %v1596
    %v1717 = vpop.f32.mrb[0].mxu0
    %v1718 = vadd.f32 %v1619, %v1717
    %v1719 = vpop.f32.mrb[0].mxu0
    %1720 = vmatprep.mubr.f32.mxu0 0.0
    %1721 = vmatmul.mubr.f32.gmra.mrb[0].mxu0 %v1597
    %v1722 = vpop.f32.mrb[0].mxu0
    %v1723 = vadd.f32 %v1619, %v1722
    %v1724 = vpop.f32.mrb[0].mxu0
    %1725 = vdwg.mxu0
    %v1726 = vmul.f32 %v1688, 0.7
    %v1727 = vmul.f32 %v1693, 0.7
    %v1728 = vmul.f32 %v1698, 0.7
    %v1729 = vmul.f32 %v1703, 0.7
    %v1730 = vmul.f32 %v1708, 0.7
    %v1731 = vmul.f32 %v1713, 0.7
    %v1732 = vmul.f32 %v1718, 0.7
    %v1733 = vmul.f32 %v1723, 0.7
    %v1734 = vmax.f32 %v1688, %v1726
    %v1735 = vmax.f32 %v1693, %v1727
    %v1736 = vmax.f32 %v1698, %v1728
    %v1737 = vmax.f32 %v1703, %v1729
    %v1738 = vmax.f32 %v1708, %v1730
    %v1739 = vmax.f32 %v1713, %v1731
    %v1740 = vmax.f32 %v1718, %v1732
    %v1741 = vmax.f32 %v1723, %v1733
    %1742 = vst [vmem:[#allocation2] sm:$0xff] %v1734
    %1743 = vst [vmem:[#allocation2 + $0x8] sm:$0xff] %v1735
    %1744 = vst [vmem:[#allocation2 + $0x10] sm:$0xff] %v1736
    %1745 = vst [vmem:[#allocation2 + $0x18] sm:$0xff] %v1737
    %1746 = vst [vmem:[#allocation2 + $0x20] sm:$0xff] %v1738
    %1747 = vst [vmem:[#allocation2 + $0x28] sm:$0xff] %v1739
    %1748 = vst [vmem:[#allocation2 + $0x30] sm:$0xff] %v1740
    %1749 = vst [vmem:[#allocation2 + $0x38] sm:$0xff] %v1741
    %1750 = vst.msk [vmem:[%s22] sm:$0xff] %vm1165, %v760
    %1751 = vst.msk [vmem:[%s22 + $0x8] sm:$0xff] %vm1165, %v765
    %1752 = vst.msk [vmem:[%s22 + $0x10] sm:$0xff] %vm1165, %v770
    %1753 = vst.msk [vmem:[%s22 + $0x18] sm:$0xff] %vm1165, %v775
    %1754 = vst.msk [vmem:[%s22 + $0x20] sm:$0xff] %vm1165, %v780
    %1755 = vst.msk [vmem:[%s22 + $0x28] sm:$0xff] %vm1165, %v785
    %1756 = vst.msk [vmem:[%s22 + $0x30] sm:$0xff] %vm1165, %v790
    %1757 = vst.msk [vmem:[%s22 + $0x38] sm:$0xff] %vm1165, %v795
    %1766 = vrot.lane.b32.xlu0 %v910, 96
    %v1767 = vpop.permute.xlu0 %1766
    %1768 = vrot.lane.b32.xlu0 %v911, 96
    %v1769 = vpop.permute.xlu0 %1768
    %1770 = vrot.lane.b32.xlu0 %v912, 96
    %v1771 = vpop.permute.xlu0 %1770
    %1772 = vrot.lane.b32.xlu0 %v913, 96
    %v1773 = vpop.permute.xlu0 %1772
    %1774 = vrot.lane.b32.xlu0 %v914, 96
    %v1775 = vpop.permute.xlu0 %1774
    %1776 = vrot.lane.b32.xlu0 %v915, 96
    %v1777 = vpop.permute.xlu0 %1776
    %1778 = vrot.lane.b32.xlu0 %v916, 96
    %v1779 = vpop.permute.xlu0 %1778
    %1780 = vrot.lane.b32.xlu0 %v917, 96
    %v1781 = vpop.permute.xlu0 %1780
    %1790 = vst.msk [vmem:[%s23] sm:$0xff] %vm1165, %v1767
    %1791 = vst.msk [vmem:[%s23 + $0x8] sm:$0xff] %vm1165, %v1769
    %1792 = vst.msk [vmem:[%s23 + $0x10] sm:$0xff] %vm1165, %v1771
    %1793 = vst.msk [vmem:[%s23 + $0x18] sm:$0xff] %vm1165, %v1773
    %1794 = vst.msk [vmem:[%s23 + $0x20] sm:$0xff] %vm1165, %v1775
    %1795 = vst.msk [vmem:[%s23 + $0x28] sm:$0xff] %vm1165, %v1777
    %1796 = vst.msk [vmem:[%s23 + $0x30] sm:$0xff] %vm1165, %v1779
    %1797 = vst.msk [vmem:[%s23 + $0x38] sm:$0xff] %vm1165, %v1781
    %1798 = vst.msk [vmem:[%s24] sm:$0xff] %vm1165, %v1046
    %1799 = vst.msk [vmem:[%s24 + $0x8] sm:$0xff] %vm1165, %v1047
    %1800 = vst.msk [vmem:[%s24 + $0x10] sm:$0xff] %vm1165, %v1048
    %1801 = vst.msk [vmem:[%s24 + $0x18] sm:$0xff] %vm1165, %v1049
    %1802 = vst.msk [vmem:[%s24 + $0x20] sm:$0xff] %vm1165, %v1050
    %1803 = vst.msk [vmem:[%s24 + $0x28] sm:$0xff] %vm1165, %v1051
    %1804 = vst.msk [vmem:[%s24 + $0x30] sm:$0xff] %vm1165, %v1052
    %1805 = vst.msk [vmem:[%s24 + $0x38] sm:$0xff] %vm1165, %v1053
    // Predicated region
    $region86: #{vae_forward.1} parent=1 // pred_check
      _
    $region87: #{vae_forward.1} parent=1 // pred_check_branch
      %1807 = sbr.rel (0) target = $region89
    $region88: #{vae_forward.1} parent=1 // pred_region
      %s1809 = ssub.s32 1024, 1024
      %1810 = vsyncadd [#allocation3], %s1809
      %s1811 = sshll.u32 [#allocation2], 4
      %s1812 = int_to_ptr.vmem [resolvable:$true] %s1811
      %1817 = dma.vmem_to_hbm [thread:$0]  %s1812, 1024, %s21, [#allocation3], 128, 128, 8
    $region89: #{vae_forward.1} parent=1 // pred_fallthru
      _
    // Predicated region
    $region90: #{vae_forward.1} parent=1 // pred_check
      _
    $region91: #{vae_forward.1} parent=1 // pred_check_branch
      %1819 = sbr.rel (0) target = $region93
    $region92: #{vae_forward.1} parent=1 // pred_region
      _
    $region93: #{vae_forward.1} parent=1 // pred_fallthru
      _
    // Predicated region
    $region94: #{vae_forward.1} parent=1 // pred_check
      _
    $region95: #{vae_forward.1} parent=1 // pred_check_branch
      %1821 = sbr.rel (0) target = $region97
    $region96: #{vae_forward.1} parent=1 // pred_region
      _
    $region97: #{vae_forward.1} parent=1 // pred_fallthru
      _
    // Predicated region
    $region98: #{vae_forward.1} parent=1 // pred_check
      _
    $region99: #{vae_forward.1} parent=1 // pred_check_branch
      %1823 = sbr.rel (0) target = $region101
    $region100: #{vae_forward.1} parent=1 // pred_region
      _
    $region101: #{vae_forward.1} parent=1 // pred_fallthru
      _
    // Predicated region
    $region102: #{vae_forward.1} parent=1 // pred_check
      _
    $region103: #{vae_forward.1} parent=1 // pred_check_branch
      %1825 = sbr.rel (0) target = $region105
    $region104: #{vae_forward.1} parent=1 // pred_region
      %1826 = dma.done [#allocation3], 1024
    $region105: #{vae_forward.1} parent=1 // pred_fallthru
      _
    // Predicated region
    $region106: #{vae_forward.1} parent=1 // pred_check
      _
    $region107: #{vae_forward.1} parent=1 // pred_check_branch
      %1828 = sbr.rel (0) target = $region109
    $region108: #{vae_forward.1} parent=1 // pred_region
      _
    $region109: #{vae_forward.1} parent=1 // pred_fallthru
      _
    // Predicated region
    $region110: #{vae_forward.1} parent=1 // pred_check
      _
    $region111: #{vae_forward.1} parent=1 // pred_check_branch
      %1830 = sbr.rel (0) target = $region113
    $region112: #{vae_forward.1} parent=1 // pred_region
      _
    $region113: #{vae_forward.1} parent=1 // pred_fallthru
      _
    // Predicated region
    $region114: #{vae_forward.1} parent=1 // pred_check
      _
    $region115: #{vae_forward.1} parent=1 // pred_check_branch
      %1832 = sbr.rel (0) target = $region117
    $region116: #{vae_forward.1} parent=1 // pred_region
      _
    $region117: #{vae_forward.1} parent=1 // pred_fallthru
      _
    %1833 = vsyncpa [#allocation3], 1

</llo_original>
